<compile_context>
chip_gen: v6e
topology: v6e:2x2x1
jax: 0.10.0
libtpu: 0.0.40
codegen_flags: <defaults>
</compile_context>

<pallas_src>
import functools
import math

import jax
import jax.numpy as jnp
from jax import lax
from jax.experimental import pallas as pl
from jax.experimental.pallas import tpu as pltpu


@functools.lru_cache(maxsize=None)
def _vmem_limit_bytes():
    # ~7/8 of physical per-core VMEM, capped at 100 MiB (v7x: 56 MiB, v5e/v6e: 100 MiB).
    try:
        cap = int(pltpu.get_tpu_info().vmem_capacity_bytes)
    except Exception:
        cap = 128 * 1024 * 1024
    return int(min(cap * 7 // 8, 100 * 1024 * 1024))


# ----------------------------- in-kernel helpers -----------------------------

def _layernorm(x, w, b, eps=1e-5):
    # x: (rows, C) f32, w/b: (1, C) f32 — PyTorch LayerNorm (population variance).
    mu = jnp.mean(x, axis=-1, keepdims=True)
    var = jnp.mean((x - mu) ** 2, axis=-1, keepdims=True)
    return (x - mu) * lax.rsqrt(var + eps) * w + b


def _gelu_tanh(x):
    # GELU(approximate='tanh'), f32
    c = math.sqrt(2.0 / math.pi)
    return 0.5 * x * (1.0 + jnp.tanh(c * (x + 0.044715 * x * x * x)))


# ------------------------- block kernel 1: LN1 + QKV --------------------------

def qkv_kernel(x_ref, ln1w_ref, ln1b_ref, wqkv_ref, bqkv_ref,
               q_ref, k_ref, v_ref, *, scale):
    x = x_ref[0]                                     # (tq, C) f32
    C = x.shape[-1]
    h = _layernorm(x, ln1w_ref[...], ln1b_ref[...])
    qkv = jnp.dot(h.astype(jnp.bfloat16), wqkv_ref[...],
                  preferred_element_type=jnp.float32) + bqkv_ref[...]   # (tq, 3C) f32
    # fold 1/sqrt(hd) into q once; write 3 lane-dense (tq, C) bf16 slabs
    q_ref[0] = (qkv[:, 0 * C:1 * C] * scale).astype(jnp.bfloat16)
    k_ref[0] = qkv[:, 1 * C:2 * C].astype(jnp.bfloat16)
    v_ref[0] = qkv[:, 2 * C:3 * C].astype(jnp.bfloat16)


# ---------------- block kernel 2: attention + proj + LN2 + MLP ----------------

def attn_mlp_kernel(x_ref, q_ref, k_ref, v_ref,
                    wpr_ref, bpr_ref, ln2w_ref, ln2b_ref,
                    wfc_ref, bfc_ref, wp2_ref, bp2_ref,
                    o_ref, *, n_head):
    x = x_ref[0]                          # (tq, C) f32
    tq, C = x.shape
    hd = C // n_head
    q = q_ref[0]                          # (tq, C) bf16, pre-scaled
    k = k_ref[0]                          # (T,  C) bf16 (resident across q tiles)
    v = v_ref[0]                          # (T,  C) bf16
    T = k.shape[0]

    # causal mask built once per grid step, shared by all heads
    i = pl.program_id(1)                  # query-row tile index
    qpos = i * tq + lax.broadcasted_iota(jnp.int32, (tq, T), 0)
    kpos = lax.broadcasted_iota(jnp.int32, (tq, T), 1)
    causal = qpos >= kpos

    # ---- causal self-attention, per head (only (tq, T) scores live at a time) ----
    ctx_heads = []
    for hh in range(n_head):              # static loop, lane slices of the slabs
        sl = slice(hh * hd, (hh + 1) * hd)
        s = lax.dot_general(q[:, sl], k[:, sl],
                            dimension_numbers=(((1,), (1,)), ((), ())),
                            preferred_element_type=jnp.float32)          # (tq, T) f32
        s = jnp.where(causal, s, -1e30)
        m = jnp.max(s, axis=-1, keepdims=True)
        e = jnp.exp(s - m)
        p = e * pl.reciprocal(jnp.sum(e, axis=-1, keepdims=True), approx=False)
        ctx_heads.append(
            jnp.dot(p.astype(jnp.bfloat16), v[:, sl],
                    preferred_element_type=jnp.float32).astype(jnp.bfloat16))
    ctx = jnp.concatenate(ctx_heads, axis=-1)          # (tq, C) bf16

    # output projection: one K=C matmul (no per-head K=hd matmuls, no H-way sum)
    y = jnp.dot(ctx, wpr_ref[...], preferred_element_type=jnp.float32) + bpr_ref[...]
    x = x + y

    # ---- MLP ----
    h2 = _layernorm(x, ln2w_ref[...], ln2b_ref[...])
    f = jnp.dot(h2.astype(jnp.bfloat16), wfc_ref[...],
                preferred_element_type=jnp.float32) + bfc_ref[...]
    f = _gelu_tanh(f)
    f = jnp.dot(f.astype(jnp.bfloat16), wp2_ref[...],
                preferred_element_type=jnp.float32) + bp2_ref[...]
    o_ref[0] = x + f


# --------------------------- block wrapper ------------------------------------

def _row_tile(T):
    # 256-wide row tiles keep the 256x256 MXUs on v6e/v7x full.
    # TODO(synk): pick 128 on v5e (128x128 MXUs, tighter bandwidth) via get_tpu_info.
    for t in (256, 128):
        if T % t == 0:
            return t
    return T


def run_block(x, lp, n_head, *, tq):
    B, T, C = x.shape
    hd = C // n_head
    nqt = T // tq
    scale = 1.0 / math.sqrt(hd)
    vmem = _vmem_limit_bytes()

    full = lambda a: pl.BlockSpec(a.shape, lambda *_: (0,) * a.ndim)

    slab = jax.ShapeDtypeStruct((B, T, C), jnp.bfloat16)
    q, k, v = pl.pallas_call(
        functools.partial(qkv_kernel, scale=scale),
        out_shape=(slab, slab, slab),
        grid=(B, nqt),
        in_specs=[pl.BlockSpec((1, tq, C), lambda b, i: (b, i, 0)),
                  full(lp['ln1_w']), full(lp['ln1_b']),
                  full(lp['w_qkv']), full(lp['b_qkv'])],
        out_specs=(pl.BlockSpec((1, tq, C), lambda b, i: (b, i, 0)),) * 3,
        compiler_params=pltpu.CompilerParams(
            dimension_semantics=("parallel", "parallel"),
            vmem_limit_bytes=vmem),
    )(x, lp['ln1_w'], lp['ln1_b'], lp['w_qkv'], lp['b_qkv'])

    kv_spec = pl.BlockSpec((1, T, C), lambda b, i: (b, 0, 0))
    return pl.pallas_call(
        functools.partial(attn_mlp_kernel, n_head=n_head),
        out_shape=jax.ShapeDtypeStruct((B, T, C), jnp.float32),
        # b outer, row-tile inner; inner axis "arbitrary" so megacore splits only
        # over B and K/V stay resident across q tiles on each core.
        grid=(B, nqt),
        in_specs=[pl.BlockSpec((1, tq, C), lambda b, i: (b, i, 0)),   # x tile
                  pl.BlockSpec((1, tq, C), lambda b, i: (b, i, 0)),   # q tile
                  kv_spec, kv_spec,                                   # full K, V
                  full(lp['w_proj']), full(lp['b_proj']),
                  full(lp['ln2_w']), full(lp['ln2_b']),
                  full(lp['w_fc']), full(lp['b_fc']),
                  full(lp['w_proj2']), full(lp['b_proj2'])],
        out_specs=pl.BlockSpec((1, tq, C), lambda b, i: (b, i, 0)),
        compiler_params=pltpu.CompilerParams(
            dimension_semantics=("parallel", "arbitrary"),
            vmem_limit_bytes=vmem),
    )(x, q, k, v, lp['w_proj'], lp['b_proj'], lp['ln2_w'], lp['ln2_b'],
      lp['w_fc'], lp['b_fc'], lp['w_proj2'], lp['b_proj2'])


# --------------------------- final LN + lm_head -------------------------------

def head_kernel(x_ref, lnfw_ref, lnfb_ref, wte_ref, o_ref, xn_ref):
    # Final LayerNorm computed once per batch row (at the first vocab tile) and
    # cached in VMEM scratch; vocab tiles of bf16 wte stream past it.
    @pl.when(pl.program_id(1) == 0)
    def _():
        xn_ref[...] = _layernorm(x_ref[0], lnfw_ref[...],
                                 lnfb_ref[...]).astype(jnp.bfloat16)
    # logits tile = xn @ wte_tile.T : contract over C with dot_general so the
    # (V, C) embedding matrix is never transposed in HBM.
    o_ref[0] = lax.dot_general(
        xn_ref[...], wte_ref[...],
        dimension_numbers=(((1,), (1,)), ((), ())),
        preferred_element_type=jnp.float32)


def run_head(x, lnf_w, lnf_b, wte_lm, vocab):
    B, T, C = x.shape
    Vp = wte_lm.shape[0]                 # padded to a multiple of 256 in prepare_params
    tv = 512 if Vp % 512 == 0 else 256
    nvt = Vp // tv
    vmem = _vmem_limit_bytes()

    # TODO(synk): emit bf16 (or last-token-only) logits for inference to cut writeback.
    logits = pl.pallas_call(
        head_kernel,
        out_shape=jax.ShapeDtypeStruct((B, T, Vp), jnp.float32),
        grid=(B, nvt),                   # b outermost: x/xn resident while wte streams
        in_specs=[pl.BlockSpec((1, T, C), lambda b, v: (b, 0, 0)),
                  pl.BlockSpec((1, C), lambda b, v: (0, 0)),
                  pl.BlockSpec((1, C), lambda b, v: (0, 0)),
                  pl.BlockSpec((tv, C), lambda b, v: (v, 0))],
        out_specs=pl.BlockSpec((1, T, tv), lambda b, v: (b, 0, v)),
        scratch_shapes=[pltpu.VMEM((T, C), jnp.bfloat16)],
        compiler_params=pltpu.CompilerParams(
            # vocab axis MUST be 'arbitrary': xn is written at v==0 and reused.
            dimension_semantics=("parallel", "arbitrary"),
            vmem_limit_bytes=vmem),
    )(x, lnf_w, lnf_b, wte_lm)
    return logits[:, :, :vocab] if Vp != vocab else logits


# --------------------------- one-time param prep -------------------------------

def prepare_params(params):
    """Hoisted, one-time weight preprocessing: bf16 copies of every MXU-feeding
    matrix and the lane-padded bf16 (weight-tied) lm_head matrix.  Run once,
    outside the jitted forward, so no per-step cast/pad HBM traffic."""
    bf16 = jnp.bfloat16
    V, C = params['wte'].shape
    Vp = ((V + 255) // 256) * 256        # lane-dense logits stores + aligned MXU N
    wte_lm = params['wte'].astype(bf16)
    if Vp != V:
        wte_lm = jnp.pad(wte_lm, ((0, Vp - V), (0, 0)))
    prep = {
        'wte': params['wte'],            # f32, embedding gather
        'wpe': params['wpe'],
        'wte_lm': wte_lm,                # bf16, padded, streamed by the head kernel
        'ln_f_w': params['ln_f_w'], 'ln_f_b': params['ln_f_b'],
        'blocks': [],
    }
    for lp in params['blocks']:
        prep['blocks'].append({
            'ln1_w': lp['ln1_w'], 'ln1_b': lp['ln1_b'],
            'w_qkv': lp['w_qkv'].astype(bf16), 'b_qkv': lp['b_qkv'],
            'w_proj': lp['w_proj'].astype(bf16), 'b_proj': lp['b_proj'],
            'ln2_w': lp['ln2_w'], 'ln2_b': lp['ln2_b'],
            'w_fc': lp['w_fc'].astype(bf16), 'b_fc': lp['b_fc'],
            'w_proj2': lp['w_proj2'].astype(bf16), 'b_proj2': lp['b_proj2'],
        })
    return prep


# ------------------------------- full forward ---------------------------------

def gpt_forward(prep, input_ids, n_head):
    B, T = input_ids.shape
    tok = prep['wte'][input_ids]                 # (B, T, C)  — glue gather
    pos = prep['wpe'][:T][None, :, :]            # (1, T, C)
    x = (tok + pos).astype(jnp.float32)
    tq = _row_tile(T)
    for lp in prep['blocks']:
        x = run_block(x, lp, n_head, tq=tq)
    V = prep['wte'].shape[0]
    # weight tying: lm_head weight == wte (bf16 copy, untransposed)
    return run_head(x, prep['ln_f_w'], prep['ln_f_b'], prep['wte_lm'], V)


# ------------------------------- reference (JAX) -------------------------------

def _ref_ln(x, w, b, eps=1e-5):
    mu = jnp.mean(x, -1, keepdims=True)
    var = jnp.mean((x - mu) ** 2, -1, keepdims=True)
    return (x - mu) / jnp.sqrt(var + eps) * w + b


def gpt_forward_ref(params, input_ids, n_head):
    B, T = input_ids.shape
    x = params['wte'][input_ids] + params['wpe'][:T][None]
    for lp in params['blocks']:
        C = x.shape[-1]
        hd = C // n_head
        h = _ref_ln(x, lp['ln1_w'], lp['ln1_b'])
        qkv = h @ lp['w_qkv'] + lp['b_qkv']
        q, k, v = jnp.split(qkv, 3, axis=-1)
        q = q.reshape(B, T, n_head, hd).transpose(0, 2, 1, 3)
        k = k.reshape(B, T, n_head, hd).transpose(0, 2, 1, 3)
        v = v.reshape(B, T, n_head, hd).transpose(0, 2, 1, 3)
        s = jnp.einsum('bhtd,bhsd->bhts', q, k) / math.sqrt(hd)
        mask = jnp.tril(jnp.ones((T, T), bool))
        s = jnp.where(mask, s, -1e30)
        p = jax.nn.softmax(s, axis=-1)
        y = jnp.einsum('bhts,bhsd->bhtd', p, v).transpose(0, 2, 1, 3).reshape(B, T, C)
        x = x + y @ lp['w_proj'] + lp['b_proj']
        h2 = _ref_ln(x, lp['ln2_w'], lp['ln2_b'])
        f = jax.nn.gelu(h2 @ lp['w_fc'] + lp['b_fc'], approximate=True)
        x = x + f @ lp['w_proj2'] + lp['b_proj2']
    x = _ref_ln(x, params['ln_f_w'], params['ln_f_b'])
    return x @ params['wte'].T


# ------------------------------- params init ----------------------------------

def init_params(key, *, vocab, block_size, n_layer, n_embd):
    ks = jax.random.split(key, 4 + 6 * n_layer)
    std = 0.02
    C = n_embd
    params = {
        'wte': std * jax.random.normal(ks[0], (vocab, C), jnp.float32),
        'wpe': std * jax.random.normal(ks[1], (block_size, C), jnp.float32),
        'ln_f_w': jnp.ones((1, C), jnp.float32),
        'ln_f_b': jnp.zeros((1, C), jnp.float32),
        'blocks': [],
    }
    proj_std = std * (2 * n_layer) ** -0.5
    for l in range(n_layer):
        kk = jax.random.split(ks[4 + l], 4)
        # Linear weights stored as [in, out] (PyTorch [out, in] pre-transposed).
        params['blocks'].append({
            'ln1_w': jnp.ones((1, C), jnp.float32),
            'ln1_b': jnp.zeros((1, C), jnp.float32),
            'w_qkv': std * jax.random.normal(kk[0], (C, 3 * C), jnp.float32),
            'b_qkv': jnp.zeros((1, 3 * C), jnp.float32),
            'w_proj': proj_std * jax.random.normal(kk[1], (C, C), jnp.float32),
            'b_proj': jnp.zeros((1, C), jnp.float32),
            'ln2_w': jnp.ones((1, C), jnp.float32),
            'ln2_b': jnp.zeros((1, C), jnp.float32),
            'w_fc': std * jax.random.normal(kk[2], (C, 4 * C), jnp.float32),
            'b_fc': jnp.zeros((1, 4 * C), jnp.float32),
            'w_proj2': proj_std * jax.random.normal(kk[3], (4 * C, C), jnp.float32),
            'b_proj2': jnp.zeros((1, C), jnp.float32),
        })
    return params


# ----------------------------------- main --------------------------------------

if __name__ == "__main__":
    # Small GPTConfig: block_size=16, vocab_size=128, n_layer=2, n_head=2, n_embd=32
    B, T = 2, 8
    VOCAB, BLOCK_SIZE, N_LAYER, N_HEAD, N_EMBD = 128, 16, 2, 2, 32

    key = jax.random.PRNGKey(0)
    pkey, ikey = jax.random.split(key)
    params = init_params(pkey, vocab=VOCAB, block_size=BLOCK_SIZE,
                         n_layer=N_LAYER, n_embd=N_EMBD)
    input_ids = jax.random.randint(ikey, (B, T), 0, VOCAB, dtype=jnp.int32)

    prep = jax.block_until_ready(prepare_params(params))   # one-time weight prep

    fwd = jax.jit(functools.partial(gpt_forward, n_head=N_HEAD))
    logits = jax.block_until_ready(fwd(prep, input_ids))
    assert logits.shape == (B, T, VOCAB)

    ref = gpt_forward_ref(params, input_ids, N_HEAD)
    max_err = float(jnp.max(jnp.abs(logits - ref)))
    # kernel uses bf16 matmul operands -> small, bounded deviation from pure-f32 ref
    assert jnp.allclose(logits, ref, atol=2e-2, rtol=2e-2), \
        f"mismatch vs reference (max abs err {max_err})"

    # TODO(synk): cross-entropy loss path (labels != None) is not kernelized.
    print("KERNEL_OK")
</pallas_src>

<mosaic_0001>
module attributes {stable_mosaic.version = 11 : i64} {
  func.func @qkv_kernel(%arg0: i32, %arg1: i32, %arg2: memref<1x8x32xf32, #tpu.memory_space<vmem>>, %arg3: memref<1x32xf32, #tpu.memory_space<vmem>>, %arg4: memref<1x32xf32, #tpu.memory_space<vmem>>, %arg5: memref<32x96xbf16, #tpu.memory_space<vmem>>, %arg6: memref<1x96xf32, #tpu.memory_space<vmem>>, %arg7: memref<1x8x32xbf16, #tpu.memory_space<vmem>>, %arg8: memref<1x8x32xbf16, #tpu.memory_space<vmem>>, %arg9: memref<1x8x32xbf16, #tpu.memory_space<vmem>>) attributes {dimension_semantics = [#tpu.dimension_semantics<parallel>, #tpu.dimension_semantics<parallel>], iteration_bounds = array<i64: 2, 1>, scalar_prefetch = 0 : i64, scratch_operands = 0 : i64, tpu.core_type = #tpu.core_type<tc>, window_params = [{transform_indices = @transform_0, window_bounds = array<i64: 1, 8, 32>}, {pipeline_mode = #tpu.pipeline_mode<synchronous>, transform_indices = @transform_1, window_bounds = array<i64: 1, 32>}, {pipeline_mode = #tpu.pipeline_mode<synchronous>, transform_indices = @transform_2, window_bounds = array<i64: 1, 32>}, {pipeline_mode = #tpu.pipeline_mode<synchronous>, transform_indices = @transform_3, window_bounds = array<i64: 32, 96>}, {pipeline_mode = #tpu.pipeline_mode<synchronous>, transform_indices = @transform_4, window_bounds = array<i64: 1, 96>}, {transform_indices = @transform_5, window_bounds = array<i64: 1, 8, 32>}, {transform_indices = @transform_6, window_bounds = array<i64: 1, 8, 32>}, {transform_indices = @transform_7, window_bounds = array<i64: 1, 8, 32>}]} {
    %c0 = arith.constant 0 : index
    %c0_0 = arith.constant 0 : index
    %c0_1 = arith.constant 0 : index
    %0 = vector.load %arg2[%c0, %c0_0, %c0_1] : memref<1x8x32xf32, #tpu.memory_space<vmem>>, vector<1x8x32xf32>
    %1 = vector.shape_cast %0 : vector<1x8x32xf32> to vector<8x32xf32>
    %c0_2 = arith.constant 0 : index
    %c0_3 = arith.constant 0 : index
    %2 = vector.load %arg3[%c0_2, %c0_3] : memref<1x32xf32, #tpu.memory_space<vmem>>, vector<1x32xf32>
    %c0_4 = arith.constant 0 : index
    %c0_5 = arith.constant 0 : index
    %3 = vector.load %arg4[%c0_4, %c0_5] : memref<1x32xf32, #tpu.memory_space<vmem>>, vector<1x32xf32>
    %cst = arith.constant dense<0.000000e+00> : vector<8xf32>
    %4 = vector.multi_reduction <add>, %1, %cst [1] : vector<8x32xf32> to vector<8xf32>
    %5 = vector.shape_cast %4 : vector<8xf32> to vector<8x1xf32>
    %cst_6 = arith.constant 3.200000e+01 : f32
    %6 = vector.broadcast %cst_6 : f32 to vector<8x1xf32>
    %7 = arith.divf %5, %6 : vector<8x1xf32>
    %8 = vector.broadcast %7 : vector<8x1xf32> to vector<8x32xf32>
    %9 = arith.subf %1, %8 : vector<8x32xf32>
    %10 = arith.mulf %9, %9 : vector<8x32xf32>
    %cst_7 = arith.constant dense<0.000000e+00> : vector<8xf32>
    %11 = vector.multi_reduction <add>, %10, %cst_7 [1] : vector<8x32xf32> to vector<8xf32>
    %12 = vector.shape_cast %11 : vector<8xf32> to vector<8x1xf32>
    %cst_8 = arith.constant 3.200000e+01 : f32
    %13 = vector.broadcast %cst_8 : f32 to vector<8x1xf32>
    %14 = arith.divf %12, %13 : vector<8x1xf32>
    %15 = vector.broadcast %7 : vector<8x1xf32> to vector<8x32xf32>
    %16 = arith.subf %1, %15 : vector<8x32xf32>
    %cst_9 = arith.constant 9.99999974E-6 : f32
    %17 = vector.broadcast %cst_9 : f32 to vector<8x1xf32>
    %18 = arith.addf %14, %17 : vector<8x1xf32>
    %19 = math.rsqrt %18 : vector<8x1xf32>
    %20 = vector.broadcast %19 : vector<8x1xf32> to vector<8x32xf32>
    %21 = arith.mulf %16, %20 : vector<8x32xf32>
    %22 = vector.broadcast %2 : vector<1x32xf32> to vector<8x32xf32>
    %23 = arith.mulf %21, %22 : vector<8x32xf32>
    %24 = vector.broadcast %3 : vector<1x32xf32> to vector<8x32xf32>
    %25 = arith.addf %23, %24 : vector<8x32xf32>
    %26 = arith.truncf %25 : vector<8x32xf32> to vector<8x32xbf16>
    %c0_10 = arith.constant 0 : index
    %c0_11 = arith.constant 0 : index
    %27 = vector.load %arg5[%c0_10, %c0_11] : memref<32x96xbf16, #tpu.memory_space<vmem>>, vector<32x96xbf16>
    %cst_12 = arith.constant dense<0.000000e+00> : vector<8x96xf32>
    %28 = tpu.matmul %26, %27, %cst_12 {dimension_numbers = #tpu.dot_dimension_numbers<[1], [0], [0], [1], [0, 0, 1, 1], [], []>} : vector<8x32xbf16>, vector<32x96xbf16>, vector<8x96xf32> -> vector<8x96xf32>
    %c0_13 = arith.constant 0 : index
    %c0_14 = arith.constant 0 : index
    %29 = vector.load %arg6[%c0_13, %c0_14] : memref<1x96xf32, #tpu.memory_space<vmem>>, vector<1x96xf32>
    %30 = vector.broadcast %29 : vector<1x96xf32> to vector<8x96xf32>
    %31 = arith.addf %28, %30 : vector<8x96xf32>
    %32 = vector.extract_strided_slice %31 {offsets = [0, 0], sizes = [8, 32], strides = [1, 1]} : vector<8x96xf32> to vector<8x32xf32>
    %cst_15 = arith.constant 2.500000e-01 : f32
    %33 = vector.broadcast %cst_15 : f32 to vector<8x32xf32>
    %34 = arith.mulf %32, %33 : vector<8x32xf32>
    %35 = arith.truncf %34 : vector<8x32xf32> to vector<8x32xbf16>
    %c0_16 = arith.constant 0 : index
    %c0_17 = arith.constant 0 : index
    %c0_18 = arith.constant 0 : index
    %36 = vector.load %arg7[%c0_16, %c0_17, %c0_18] : memref<1x8x32xbf16, #tpu.memory_space<vmem>>, vector<1x8x32xbf16>
    %37 = vector.shape_cast %36 : vector<1x8x32xbf16> to vector<8x32xbf16>
    %38 = vector.shape_cast %35 : vector<8x32xbf16> to vector<1x8x32xbf16>
    tpu.vector_store %arg7[%c0_16, %c0_17, %c0_18], %38 {strides = array<i32>} : memref<1x8x32xbf16, #tpu.memory_space<vmem>>, vector<1x8x32xbf16>,
    %39 = vector.extract_strided_slice %31 {offsets = [0, 32], sizes = [8, 32], strides = [1, 1]} : vector<8x96xf32> to vector<8x32xf32>
    %40 = arith.truncf %39 : vector<8x32xf32> to vector<8x32xbf16>
    %c0_19 = arith.constant 0 : index
    %c0_20 = arith.constant 0 : index
    %c0_21 = arith.constant 0 : index
    %41 = vector.load %arg8[%c0_19, %c0_20, %c0_21] : memref<1x8x32xbf16, #tpu.memory_space<vmem>>, vector<1x8x32xbf16>
    %42 = vector.shape_cast %41 : vector<1x8x32xbf16> to vector<8x32xbf16>
    %43 = vector.shape_cast %40 : vector<8x32xbf16> to vector<1x8x32xbf16>
    tpu.vector_store %arg8[%c0_19, %c0_20, %c0_21], %43 {strides = array<i32>} : memref<1x8x32xbf16, #tpu.memory_space<vmem>>, vector<1x8x32xbf16>,
    %44 = vector.extract_strided_slice %31 {offsets = [0, 64], sizes = [8, 32], strides = [1, 1]} : vector<8x96xf32> to vector<8x32xf32>
    %45 = arith.truncf %44 : vector<8x32xf32> to vector<8x32xbf16>
    %c0_22 = arith.constant 0 : index
    %c0_23 = arith.constant 0 : index
    %c0_24 = arith.constant 0 : index
    %46 = vector.load %arg9[%c0_22, %c0_23, %c0_24] : memref<1x8x32xbf16, #tpu.memory_space<vmem>>, vector<1x8x32xbf16>
    %47 = vector.shape_cast %46 : vector<1x8x32xbf16> to vector<8x32xbf16>
    %48 = vector.shape_cast %45 : vector<8x32xbf16> to vector<1x8x32xbf16>
    tpu.vector_store %arg9[%c0_22, %c0_23, %c0_24], %48 {strides = array<i32>} : memref<1x8x32xbf16, #tpu.memory_space<vmem>>, vector<1x8x32xbf16>,
    return
  }
  func.func @transform_0(%arg0: i32, %arg1: i32) -> (i32, i32, i32) {
    %c0_i32 = arith.constant 0 : i32
    %c0_i32_0 = arith.constant 0 : i32
    return %arg0, %arg1, %c0_i32 : i32, i32, i32
  }
  func.func @transform_1(%arg0: i32, %arg1: i32) -> (i32, i32) {
    %c0_i32 = arith.constant 0 : i32
    %c0_i32_0 = arith.constant 0 : i32
    %c0_i32_1 = arith.constant 0 : i32
    return %c0_i32, %c0_i32_0 : i32, i32
  }
  func.func @transform_2(%arg0: i32, %arg1: i32) -> (i32, i32) {
    %c0_i32 = arith.constant 0 : i32
    %c0_i32_0 = arith.constant 0 : i32
    %c0_i32_1 = arith.constant 0 : i32
    return %c0_i32, %c0_i32_0 : i32, i32
  }
  func.func @transform_3(%arg0: i32, %arg1: i32) -> (i32, i32) {
    %c0_i32 = arith.constant 0 : i32
    %c0_i32_0 = arith.constant 0 : i32
    %c0_i32_1 = arith.constant 0 : i32
    return %c0_i32, %c0_i32_0 : i32, i32
  }
  func.func @transform_4(%arg0: i32, %arg1: i32) -> (i32, i32) {
    %c0_i32 = arith.constant 0 : i32
    %c0_i32_0 = arith.constant 0 : i32
    %c0_i32_1 = arith.constant 0 : i32
    return %c0_i32, %c0_i32_0 : i32, i32
  }
  func.func @transform_5(%arg0: i32, %arg1: i32) -> (i32, i32, i32) {
    %c0_i32 = arith.constant 0 : i32
    %c0_i32_0 = arith.constant 0 : i32
    return %arg0, %arg1, %c0_i32 : i32, i32, i32
  }
  func.func @transform_6(%arg0: i32, %arg1: i32) -> (i32, i32, i32) {
    %c0_i32 = arith.constant 0 : i32
    %c0_i32_0 = arith.constant 0 : i32
    return %arg0, %arg1, %c0_i32 : i32, i32, i32
  }
  func.func @transform_7(%arg0: i32, %arg1: i32) -> (i32, i32, i32) {
    %c0_i32 = arith.constant 0 : i32
    %c0_i32_0 = arith.constant 0 : i32
    return %arg0, %arg1, %c0_i32 : i32, i32, i32
  }
}

module attributes {stable_mosaic.version = 11 : i64} {
  func.func @head_kernel(%arg0: i32, %arg1: i32, %arg2: memref<1x8x32xf32, #tpu.memory_space<vmem>>, %arg3: memref<1x32xf32, #tpu.memory_space<vmem>>, %arg4: memref<1x32xf32, #tpu.memory_space<vmem>>, %arg5: memref<256x32xbf16, #tpu.memory_space<vmem>>, %arg6: memref<1x8x256xf32, #tpu.memory_space<vmem>>, %arg7: memref<8x32xbf16, #tpu.memory_space<vmem>>) attributes {dimension_semantics = [#tpu.dimension_semantics<parallel>, #tpu.dimension_semantics<arbitrary>], iteration_bounds = array<i64: 2, 1>, scalar_prefetch = 0 : i64, scratch_operands = 1 : i64, tpu.core_type = #tpu.core_type<tc>, window_params = [{transform_indices = @transform_0, window_bounds = array<i64: 1, 8, 32>}, {pipeline_mode = #tpu.pipeline_mode<synchronous>, transform_indices = @transform_1, window_bounds = array<i64: 1, 32>}, {pipeline_mode = #tpu.pipeline_mode<synchronous>, transform_indices = @transform_2, window_bounds = array<i64: 1, 32>}, {transform_indices = @transform_3, window_bounds = array<i64: 256, 32>}, {transform_indices = @transform_4, window_bounds = array<i64: 1, 8, 256>}]} {
    %c0_i32 = arith.constant 0 : i32
    %0 = arith.cmpi eq, %arg1, %c0_i32 : i32
    %1 = arith.extui %0 : i1 to i32
    %c0_i32_0 = arith.constant 0 : i32
    %2 = arith.cmpi ne, %1, %c0_i32_0 : i32
    scf.if %2 {
      %c0_7 = arith.constant 0 : index
      %c0_8 = arith.constant 0 : index
      %c0_9 = arith.constant 0 : index
      %9 = vector.load %arg2[%c0_7, %c0_8, %c0_9] : memref<1x8x32xf32, #tpu.memory_space<vmem>>, vector<1x8x32xf32>
      %10 = vector.shape_cast %9 : vector<1x8x32xf32> to vector<8x32xf32>
      %c0_10 = arith.constant 0 : index
      %c0_11 = arith.constant 0 : index
      %11 = vector.load %arg3[%c0_10, %c0_11] : memref<1x32xf32, #tpu.memory_space<vmem>>, vector<1x32xf32>
      %c0_12 = arith.constant 0 : index
      %c0_13 = arith.constant 0 : index
      %12 = vector.load %arg4[%c0_12, %c0_13] : memref<1x32xf32, #tpu.memory_space<vmem>>, vector<1x32xf32>
      %cst_14 = arith.constant dense<0.000000e+00> : vector<8xf32>
      %13 = vector.multi_reduction <add>, %10, %cst_14 [1] : vector<8x32xf32> to vector<8xf32>
      %14 = vector.shape_cast %13 : vector<8xf32> to vector<8x1xf32>
      %cst_15 = arith.constant 3.200000e+01 : f32
      %15 = vector.broadcast %cst_15 : f32 to vector<8x1xf32>
      %16 = arith.divf %14, %15 : vector<8x1xf32>
      %17 = vector.broadcast %16 : vector<8x1xf32> to vector<8x32xf32>
      %18 = arith.subf %10, %17 : vector<8x32xf32>
      %19 = arith.mulf %18, %18 : vector<8x32xf32>
      %cst_16 = arith.constant dense<0.000000e+00> : vector<8xf32>
      %20 = vector.multi_reduction <add>, %19, %cst_16 [1] : vector<8x32xf32> to vector<8xf32>
      %21 = vector.shape_cast %20 : vector<8xf32> to vector<8x1xf32>
      %cst_17 = arith.constant 3.200000e+01 : f32
      %22 = vector.broadcast %cst_17 : f32 to vector<8x1xf32>
      %23 = arith.divf %21, %22 : vector<8x1xf32>
      %24 = vector.broadcast %16 : vector<8x1xf32> to vector<8x32xf32>
      %25 = arith.subf %10, %24 : vector<8x32xf32>
      %cst_18 = arith.constant 9.99999974E-6 : f32
      %26 = vector.broadcast %cst_18 : f32 to vector<8x1xf32>
      %27 = arith.addf %23, %26 : vector<8x1xf32>
      %28 = math.rsqrt %27 : vector<8x1xf32>
      %29 = vector.broadcast %28 : vector<8x1xf32> to vector<8x32xf32>
      %30 = arith.mulf %25, %29 : vector<8x32xf32>
      %31 = vector.broadcast %11 : vector<1x32xf32> to vector<8x32xf32>
      %32 = arith.mulf %30, %31 : vector<8x32xf32>
      %33 = vector.broadcast %12 : vector<1x32xf32> to vector<8x32xf32>
      %34 = arith.addf %32, %33 : vector<8x32xf32>
      %35 = arith.truncf %34 : vector<8x32xf32> to vector<8x32xbf16>
      %c0_19 = arith.constant 0 : index
      %c0_20 = arith.constant 0 : index
      %36 = vector.load %arg7[%c0_19, %c0_20] : memref<8x32xbf16, #tpu.memory_space<vmem>>, vector<8x32xbf16>
      tpu.vector_store %arg7[%c0_19, %c0_20], %35 {strides = array<i32>} : memref<8x32xbf16, #tpu.memory_space<vmem>>, vector<8x32xbf16>,
    } else {
    }
    %c0 = arith.constant 0 : index
    %c0_1 = arith.constant 0 : index
    %3 = vector.load %arg7[%c0, %c0_1] : memref<8x32xbf16, #tpu.memory_space<vmem>>, vector<8x32xbf16>
    %c0_2 = arith.constant 0 : index
    %c0_3 = arith.constant 0 : index
    %4 = vector.load %arg5[%c0_2, %c0_3] : memref<256x32xbf16, #tpu.memory_space<vmem>>, vector<256x32xbf16>
    %cst = arith.constant dense<0.000000e+00> : vector<8x256xf32>
    %5 = tpu.matmul %3, %4, %cst {dimension_numbers = #tpu.dot_dimension_numbers<[1], [1], [0], [0], [0, 0, 1, 0], [], []>} : vector<8x32xbf16>, vector<256x32xbf16>, vector<8x256xf32> -> vector<8x256xf32>
    %c0_4 = arith.constant 0 : index
    %c0_5 = arith.constant 0 : index
    %c0_6 = arith.constant 0 : index
    %6 = vector.load %arg6[%c0_4, %c0_5, %c0_6] : memref<1x8x256xf32, #tpu.memory_space<vmem>>, vector<1x8x256xf32>
    %7 = vector.shape_cast %6 : vector<1x8x256xf32> to vector<8x256xf32>
    %8 = vector.shape_cast %5 : vector<8x256xf32> to vector<1x8x256xf32>
    tpu.vector_store %arg6[%c0_4, %c0_5, %c0_6], %8 {strides = array<i32>} : memref<1x8x256xf32, #tpu.memory_space<vmem>>, vector<1x8x256xf32>,
    return
  }
  func.func @transform_0(%arg0: i32, %arg1: i32) -> (i32, i32, i32) {
    %c0_i32 = arith.constant 0 : i32
    %c0_i32_0 = arith.constant 0 : i32
    %c0_i32_1 = arith.constant 0 : i32
    return %arg0, %c0_i32, %c0_i32_0 : i32, i32, i32
  }
  func.func @transform_1(%arg0: i32, %arg1: i32) -> (i32, i32) {
    %c0_i32 = arith.constant 0 : i32
    %c0_i32_0 = arith.constant 0 : i32
    %c0_i32_1 = arith.constant 0 : i32
    return %c0_i32, %c0_i32_0 : i32, i32
  }
  func.func @transform_2(%arg0: i32, %arg1: i32) -> (i32, i32) {
    %c0_i32 = arith.constant 0 : i32
    %c0_i32_0 = arith.constant 0 : i32
    %c0_i32_1 = arith.constant 0 : i32
    return %c0_i32, %c0_i32_0 : i32, i32
  }
  func.func @transform_3(%arg0: i32, %arg1: i32) -> (i32, i32) {
    %c0_i32 = arith.constant 0 : i32
    %c0_i32_0 = arith.constant 0 : i32
    return %arg1, %c0_i32 : i32, i32
  }
  func.func @transform_4(%arg0: i32, %arg1: i32) -> (i32, i32, i32) {
    %c0_i32 = arith.constant 0 : i32
    %c0_i32_0 = arith.constant 0 : i32
    return %arg0, %c0_i32, %arg1 : i32, i32, i32
  }
}

module attributes {stable_mosaic.version = 11 : i64} {
  func.func @attn_mlp_kernel(%arg0: i32, %arg1: i32, %arg2: memref<1x8x32xf32, #tpu.memory_space<vmem>>, %arg3: memref<1x8x32xbf16, #tpu.memory_space<vmem>>, %arg4: memref<1x8x32xbf16, #tpu.memory_space<vmem>>, %arg5: memref<1x8x32xbf16, #tpu.memory_space<vmem>>, %arg6: memref<32x32xbf16, #tpu.memory_space<vmem>>, %arg7: memref<1x32xf32, #tpu.memory_space<vmem>>, %arg8: memref<1x32xf32, #tpu.memory_space<vmem>>, %arg9: memref<1x32xf32, #tpu.memory_space<vmem>>, %arg10: memref<32x128xbf16, #tpu.memory_space<vmem>>, %arg11: memref<1x128xf32, #tpu.memory_space<vmem>>, %arg12: memref<128x32xbf16, #tpu.memory_space<vmem>>, %arg13: memref<1x32xf32, #tpu.memory_space<vmem>>, %arg14: memref<1x8x32xf32, #tpu.memory_space<vmem>>) attributes {dimension_semantics = [#tpu.dimension_semantics<parallel>, #tpu.dimension_semantics<arbitrary>], iteration_bounds = array<i64: 2, 1>, scalar_prefetch = 0 : i64, scratch_operands = 0 : i64, tpu.core_type = #tpu.core_type<tc>, window_params = [{transform_indices = @transform_0, window_bounds = array<i64: 1, 8, 32>}, {transform_indices = @transform_1, window_bounds = array<i64: 1, 8, 32>}, {transform_indices = @transform_2, window_bounds = array<i64: 1, 8, 32>}, {transform_indices = @transform_3, window_bounds = array<i64: 1, 8, 32>}, {pipeline_mode = #tpu.pipeline_mode<synchronous>, transform_indices = @transform_4, window_bounds = array<i64: 32, 32>}, {pipeline_mode = #tpu.pipeline_mode<synchronous>, transform_indices = @transform_5, window_bounds = array<i64: 1, 32>}, {pipeline_mode = #tpu.pipeline_mode<synchronous>, transform_indices = @transform_6, window_bounds = array<i64: 1, 32>}, {pipeline_mode = #tpu.pipeline_mode<synchronous>, transform_indices = @transform_7, window_bounds = array<i64: 1, 32>}, {pipeline_mode = #tpu.pipeline_mode<synchronous>, transform_indices = @transform_8, window_bounds = array<i64: 32, 128>}, {pipeline_mode = #tpu.pipeline_mode<synchronous>, transform_indices = @transform_9, window_bounds = array<i64: 1, 128>}, {pipeline_mode = #tpu.pipeline_mode<synchronous>, transform_indices = @transform_10, window_bounds = array<i64: 128, 32>}, {pipeline_mode = #tpu.pipeline_mode<synchronous>, transform_indices = @transform_11, window_bounds = array<i64: 1, 32>}, {transform_indices = @transform_12, window_bounds = array<i64: 1, 8, 32>}]} {
    %c0 = arith.constant 0 : index
    %c0_0 = arith.constant 0 : index
    %c0_1 = arith.constant 0 : index
    %0 = vector.load %arg2[%c0, %c0_0, %c0_1] : memref<1x8x32xf32, #tpu.memory_space<vmem>>, vector<1x8x32xf32>
    %1 = vector.shape_cast %0 : vector<1x8x32xf32> to vector<8x32xf32>
    %c0_2 = arith.constant 0 : index
    %c0_3 = arith.constant 0 : index
    %c0_4 = arith.constant 0 : index
    %2 = vector.load %arg3[%c0_2, %c0_3, %c0_4] : memref<1x8x32xbf16, #tpu.memory_space<vmem>>, vector<1x8x32xbf16>
    %3 = vector.shape_cast %2 : vector<1x8x32xbf16> to vector<8x32xbf16>
    %c0_5 = arith.constant 0 : index
    %c0_6 = arith.constant 0 : index
    %c0_7 = arith.constant 0 : index
    %4 = vector.load %arg4[%c0_5, %c0_6, %c0_7] : memref<1x8x32xbf16, #tpu.memory_space<vmem>>, vector<1x8x32xbf16>
    %5 = vector.shape_cast %4 : vector<1x8x32xbf16> to vector<8x32xbf16>
    %c0_8 = arith.constant 0 : index
    %c0_9 = arith.constant 0 : index
    %c0_10 = arith.constant 0 : index
    %6 = vector.load %arg5[%c0_8, %c0_9, %c0_10] : memref<1x8x32xbf16, #tpu.memory_space<vmem>>, vector<1x8x32xbf16>
    %7 = vector.shape_cast %6 : vector<1x8x32xbf16> to vector<8x32xbf16>
    %c8_i32 = arith.constant 8 : i32
    %8 = arith.muli %arg1, %c8_i32 : i32
    %9 = tpu.iota {dimensions = array<i32: 0>} : vector<8x8xi32>
    %10 = vector.broadcast %8 : i32 to vector<8x8xi32>
    %11 = arith.addi %10, %9 : vector<8x8xi32>
    %12 = tpu.iota {dimensions = array<i32: 1>} : vector<8x8xi32>
    %13 = arith.cmpi sge, %11, %12 : vector<8x8xi32>
    %14 = vector.extract_strided_slice %3 {offsets = [0, 0], sizes = [8, 16], strides = [1, 1]} : vector<8x32xbf16> to vector<8x16xbf16>
    %15 = vector.extract_strided_slice %5 {offsets = [0, 0], sizes = [8, 16], strides = [1, 1]} : vector<8x32xbf16> to vector<8x16xbf16>
    %cst = arith.constant dense<0.000000e+00> : vector<8x8xf32>
    %16 = tpu.matmul %14, %15, %cst {dimension_numbers = #tpu.dot_dimension_numbers<[1], [1], [0], [0], [0, 0, 1, 0], [], []>} : vector<8x16xbf16>, vector<8x16xbf16>, vector<8x8xf32> -> vector<8x8xf32>
    %cst_11 = arith.constant -1.000000e+30 : f32
    %17 = vector.broadcast %cst_11 : f32 to vector<8x8xf32>
    %18 = arith.select %13, %16, %17 : vector<8x8xi1>, vector<8x8xf32>
    %cst_12 = arith.constant dense<0xFF800000> : vector<8xf32>
    %19 = vector.multi_reduction <maximumf>, %18, %cst_12 [1] : vector<8x8xf32> to vector<8xf32>
    %20 = vector.shape_cast %19 : vector<8xf32> to vector<8x1xf32>
    %21 = vector.broadcast %20 : vector<8x1xf32> to vector<8x8xf32>
    %22 = arith.subf %18, %21 : vector<8x8xf32>
    %23 = math.exp %22 : vector<8x8xf32>
    %cst_13 = arith.constant dense<0.000000e+00> : vector<8xf32>
    %24 = vector.multi_reduction <add>, %23, %cst_13 [1] : vector<8x8xf32> to vector<8xf32>
    %25 = vector.shape_cast %24 : vector<8xf32> to vector<8x1xf32>
    %26 = tpu.reciprocal %25 : vector<8x1xf32> -> vector<8x1xf32>
    %27 = vector.broadcast %26 : vector<8x1xf32> to vector<8x8xf32>
    %28 = arith.mulf %23, %27 : vector<8x8xf32>
    %29 = arith.truncf %28 : vector<8x8xf32> to vector<8x8xbf16>
    %30 = vector.extract_strided_slice %7 {offsets = [0, 0], sizes = [8, 16], strides = [1, 1]} : vector<8x32xbf16> to vector<8x16xbf16>
    %cst_14 = arith.constant dense<0.000000e+00> : vector<8x16xf32>
    %31 = tpu.matmul %29, %30, %cst_14 {dimension_numbers = #tpu.dot_dimension_numbers<[1], [0], [0], [1], [0, 0, 1, 1], [], []>} : vector<8x8xbf16>, vector<8x16xbf16>, vector<8x16xf32> -> vector<8x16xf32>
    %32 = arith.truncf %31 : vector<8x16xf32> to vector<8x16xbf16>
    %33 = vector.extract_strided_slice %3 {offsets = [0, 16], sizes = [8, 16], strides = [1, 1]} : vector<8x32xbf16> to vector<8x16xbf16>
    %34 = vector.extract_strided_slice %5 {offsets = [0, 16], sizes = [8, 16], strides = [1, 1]} : vector<8x32xbf16> to vector<8x16xbf16>
    %cst_15 = arith.constant dense<0.000000e+00> : vector<8x8xf32>
    %35 = tpu.matmul %33, %34, %cst_15 {dimension_numbers = #tpu.dot_dimension_numbers<[1], [1], [0], [0], [0, 0, 1, 0], [], []>} : vector<8x16xbf16>, vector<8x16xbf16>, vector<8x8xf32> -> vector<8x8xf32>
    %cst_16 = arith.constant -1.000000e+30 : f32
    %36 = vector.broadcast %cst_16 : f32 to vector<8x8xf32>
    %37 = arith.select %13, %35, %36 : vector<8x8xi1>, vector<8x8xf32>
    %cst_17 = arith.constant dense<0xFF800000> : vector<8xf32>
    %38 = vector.multi_reduction <maximumf>, %37, %cst_17 [1] : vector<8x8xf32> to vector<8xf32>
    %39 = vector.shape_cast %38 : vector<8xf32> to vector<8x1xf32>
    %40 = vector.broadcast %39 : vector<8x1xf32> to vector<8x8xf32>
    %41 = arith.subf %37, %40 : vector<8x8xf32>
    %42 = math.exp %41 : vector<8x8xf32>
    %cst_18 = arith.constant dense<0.000000e+00> : vector<8xf32>
    %43 = vector.multi_reduction <add>, %42, %cst_18 [1] : vector<8x8xf32> to vector<8xf32>
    %44 = vector.shape_cast %43 : vector<8xf32> to vector<8x1xf32>
    %45 = tpu.reciprocal %44 : vector<8x1xf32> -> vector<8x1xf32>
    %46 = vector.broadcast %45 : vector<8x1xf32> to vector<8x8xf32>
    %47 = arith.mulf %42, %46 : vector<8x8xf32>
    %48 = arith.truncf %47 : vector<8x8xf32> to vector<8x8xbf16>
    %49 = vector.extract_strided_slice %7 {offsets = [0, 16], sizes = [8, 16], strides = [1, 1]} : vector<8x32xbf16> to vector<8x16xbf16>
    %cst_19 = arith.constant dense<0.000000e+00> : vector<8x16xf32>
    %50 = tpu.matmul %48, %49, %cst_19 {dimension_numbers = #tpu.dot_dimension_numbers<[1], [0], [0], [1], [0, 0, 1, 1], [], []>} : vector<8x8xbf16>, vector<8x16xbf16>, vector<8x16xf32> -> vector<8x16xf32>
    %51 = arith.truncf %50 : vector<8x16xf32> to vector<8x16xbf16>
    %52 = tpu.concatenate %32, %51 in 1 : vector<8x16xbf16>, vector<8x16xbf16> -> vector<8x32xbf16>
    %c0_20 = arith.constant 0 : index
    %c0_21 = arith.constant 0 : index
    %53 = vector.load %arg6[%c0_20, %c0_21] : memref<32x32xbf16, #tpu.memory_space<vmem>>, vector<32x32xbf16>
    %cst_22 = arith.constant dense<0.000000e+00> : vector<8x32xf32>
    %54 = tpu.matmul %52, %53, %cst_22 {dimension_numbers = #tpu.dot_dimension_numbers<[1], [0], [0], [1], [0, 0, 1, 1], [], []>} : vector<8x32xbf16>, vector<32x32xbf16>, vector<8x32xf32> -> vector<8x32xf32>
    %c0_23 = arith.constant 0 : index
    %c0_24 = arith.constant 0 : index
    %55 = vector.load %arg7[%c0_23, %c0_24] : memref<1x32xf32, #tpu.memory_space<vmem>>, vector<1x32xf32>
    %56 = vector.broadcast %55 : vector<1x32xf32> to vector<8x32xf32>
    %57 = arith.addf %54, %56 : vector<8x32xf32>
    %58 = arith.addf %1, %57 : vector<8x32xf32>
    %c0_25 = arith.constant 0 : index
    %c0_26 = arith.constant 0 : index
    %59 = vector.load %arg8[%c0_25, %c0_26] : memref<1x32xf32, #tpu.memory_space<vmem>>, vector<1x32xf32>
    %c0_27 = arith.constant 0 : index
    %c0_28 = arith.constant 0 : index
    %60 = vector.load %arg9[%c0_27, %c0_28] : memref<1x32xf32, #tpu.memory_space<vmem>>, vector<1x32xf32>
    %cst_29 = arith.constant dense<0.000000e+00> : vector<8xf32>
    %61 = vector.multi_reduction <add>, %58, %cst_29 [1] : vector<8x32xf32> to vector<8xf32>
    %62 = vector.shape_cast %61 : vector<8xf32> to vector<8x1xf32>
    %cst_30 = arith.constant 3.200000e+01 : f32
    %63 = vector.broadcast %cst_30 : f32 to vector<8x1xf32>
    %64 = arith.divf %62, %63 : vector<8x1xf32>
    %65 = vector.broadcast %64 : vector<8x1xf32> to vector<8x32xf32>
    %66 = arith.subf %58, %65 : vector<8x32xf32>
    %67 = arith.mulf %66, %66 : vector<8x32xf32>
    %cst_31 = arith.constant dense<0.000000e+00> : vector<8xf32>
    %68 = vector.multi_reduction <add>, %67, %cst_31 [1] : vector<8x32xf32> to vector<8xf32>
    %69 = vector.shape_cast %68 : vector<8xf32> to vector<8x1xf32>
    %cst_32 = arith.constant 3.200000e+01 : f32
    %70 = vector.broadcast %cst_32 : f32 to vector<8x1xf32>
    %71 = arith.divf %69, %70 : vector<8x1xf32>
    %72 = vector.broadcast %64 : vector<8x1xf32> to vector<8x32xf32>
    %73 = arith.subf %58, %72 : vector<8x32xf32>
    %cst_33 = arith.constant 9.99999974E-6 : f32
    %74 = vector.broadcast %cst_33 : f32 to vector<8x1xf32>
    %75 = arith.addf %71, %74 : vector<8x1xf32>
    %76 = math.rsqrt %75 : vector<8x1xf32>
    %77 = vector.broadcast %76 : vector<8x1xf32> to vector<8x32xf32>
    %78 = arith.mulf %73, %77 : vector<8x32xf32>
    %79 = vector.broadcast %59 : vector<1x32xf32> to vector<8x32xf32>
    %80 = arith.mulf %78, %79 : vector<8x32xf32>
    %81 = vector.broadcast %60 : vector<1x32xf32> to vector<8x32xf32>
    %82 = arith.addf %80, %81 : vector<8x32xf32>
    %83 = arith.truncf %82 : vector<8x32xf32> to vector<8x32xbf16>
    %c0_34 = arith.constant 0 : index
    %c0_35 = arith.constant 0 : index
    %84 = vector.load %arg10[%c0_34, %c0_35] : memref<32x128xbf16, #tpu.memory_space<vmem>>, vector<32x128xbf16>
    %cst_36 = arith.constant dense<0.000000e+00> : vector<8x128xf32>
    %85 = tpu.matmul %83, %84, %cst_36 {dimension_numbers = #tpu.dot_dimension_numbers<[1], [0], [0], [1], [0, 0, 1, 1], [], []>} : vector<8x32xbf16>, vector<32x128xbf16>, vector<8x128xf32> -> vector<8x128xf32>
    %c0_37 = arith.constant 0 : index
    %c0_38 = arith.constant 0 : index
    %86 = vector.load %arg11[%c0_37, %c0_38] : memref<1x128xf32, #tpu.memory_space<vmem>>, vector<1x128xf32>
    %87 = vector.broadcast %86 : vector<1x128xf32> to vector<8x128xf32>
    %88 = arith.addf %85, %87 : vector<8x128xf32>
    %cst_39 = arith.constant 5.000000e-01 : f32
    %89 = vector.broadcast %cst_39 : f32 to vector<8x128xf32>
    %90 = arith.mulf %89, %88 : vector<8x128xf32>
    %cst_40 = arith.constant 4.471500e-02 : f32
    %91 = vector.broadcast %cst_40 : f32 to vector<8x128xf32>
    %92 = arith.mulf %91, %88 : vector<8x128xf32>
    %93 = arith.mulf %92, %88 : vector<8x128xf32>
    %94 = arith.mulf %93, %88 : vector<8x128xf32>
    %95 = arith.addf %88, %94 : vector<8x128xf32>
    %cst_41 = arith.constant 0.797884583 : f32
    %96 = vector.broadcast %cst_41 : f32 to vector<8x128xf32>
    %97 = arith.mulf %96, %95 : vector<8x128xf32>
    %98 = math.tanh %97 : vector<8x128xf32>
    %cst_42 = arith.constant 1.000000e+00 : f32
    %99 = vector.broadcast %cst_42 : f32 to vector<8x128xf32>
    %100 = arith.addf %99, %98 : vector<8x128xf32>
    %101 = arith.mulf %90, %100 : vector<8x128xf32>
    %102 = arith.truncf %101 : vector<8x128xf32> to vector<8x128xbf16>
    %c0_43 = arith.constant 0 : index
    %c0_44 = arith.constant 0 : index
    %103 = vector.load %arg12[%c0_43, %c0_44] : memref<128x32xbf16, #tpu.memory_space<vmem>>, vector<128x32xbf16>
    %cst_45 = arith.constant dense<0.000000e+00> : vector<8x32xf32>
    %104 = tpu.matmul %102, %103, %cst_45 {dimension_numbers = #tpu.dot_dimension_numbers<[1], [0], [0], [1], [0, 0, 1, 1], [], []>} : vector<8x128xbf16>, vector<128x32xbf16>, vector<8x32xf32> -> vector<8x32xf32>
    %c0_46 = arith.constant 0 : index
    %c0_47 = arith.constant 0 : index
    %105 = vector.load %arg13[%c0_46, %c0_47] : memref<1x32xf32, #tpu.memory_space<vmem>>, vector<1x32xf32>
    %106 = vector.broadcast %105 : vector<1x32xf32> to vector<8x32xf32>
    %107 = arith.addf %104, %106 : vector<8x32xf32>
    %108 = arith.addf %58, %107 : vector<8x32xf32>
    %c0_48 = arith.constant 0 : index
    %c0_49 = arith.constant 0 : index
    %c0_50 = arith.constant 0 : index
    %109 = vector.load %arg14[%c0_48, %c0_49, %c0_50] : memref<1x8x32xf32, #tpu.memory_space<vmem>>, vector<1x8x32xf32>
    %110 = vector.shape_cast %109 : vector<1x8x32xf32> to vector<8x32xf32>
    %111 = vector.shape_cast %108 : vector<8x32xf32> to vector<1x8x32xf32>
    tpu.vector_store %arg14[%c0_48, %c0_49, %c0_50], %111 {strides = array<i32>} : memref<1x8x32xf32, #tpu.memory_space<vmem>>, vector<1x8x32xf32>,
    return
  }
  func.func @transform_0(%arg0: i32, %arg1: i32) -> (i32, i32, i32) {
    %c0_i32 = arith.constant 0 : i32
    %c0_i32_0 = arith.constant 0 : i32
    return %arg0, %arg1, %c0_i32 : i32, i32, i32
  }
  func.func @transform_1(%arg0: i32, %arg1: i32) -> (i32, i32, i32) {
    %c0_i32 = arith.constant 0 : i32
    %c0_i32_0 = arith.constant 0 : i32
    return %arg0, %arg1, %c0_i32 : i32, i32, i32
  }
  func.func @transform_2(%arg0: i32, %arg1: i32) -> (i32, i32, i32) {
    %c0_i32 = arith.constant 0 : i32
    %c0_i32_0 = arith.constant 0 : i32
    %c0_i32_1 = arith.constant 0 : i32
    return %arg0, %c0_i32, %c0_i32_0 : i32, i32, i32
  }
  func.func @transform_3(%arg0: i32, %arg1: i32) -> (i32, i32, i32) {
    %c0_i32 = arith.constant 0 : i32
    %c0_i32_0 = arith.constant 0 : i32
    %c0_i32_1 = arith.constant 0 : i32
    return %arg0, %c0_i32, %c0_i32_0 : i32, i32, i32
  }
  func.func @transform_4(%arg0: i32, %arg1: i32) -> (i32, i32) {
    %c0_i32 = arith.constant 0 : i32
    %c0_i32_0 = arith.constant 0 : i32
    %c0_i32_1 = arith.constant 0 : i32
    return %c0_i32, %c0_i32_0 : i32, i32
  }
  func.func @transform_5(%arg0: i32, %arg1: i32) -> (i32, i32) {
    %c0_i32 = arith.constant 0 : i32
    %c0_i32_0 = arith.constant 0 : i32
    %c0_i32_1 = arith.constant 0 : i32
    return %c0_i32, %c0_i32_0 : i32, i32
  }
  func.func @transform_6(%arg0: i32, %arg1: i32) -> (i32, i32) {
    %c0_i32 = arith.constant 0 : i32
    %c0_i32_0 = arith.constant 0 : i32
    %c0_i32_1 = arith.constant 0 : i32
    return %c0_i32, %c0_i32_0 : i32, i32
  }
  func.func @transform_7(%arg0: i32, %arg1: i32) -> (i32, i32) {
    %c0_i32 = arith.constant 0 : i32
    %c0_i32_0 = arith.constant 0 : i32
    %c0_i32_1 = arith.constant 0 : i32
    return %c0_i32, %c0_i32_0 : i32, i32
  }
  func.func @transform_8(%arg0: i32, %arg1: i32) -> (i32, i32) {
    %c0_i32 = arith.constant 0 : i32
    %c0_i32_0 = arith.constant 0 : i32
    %c0_i32_1 = arith.constant 0 : i32
    return %c0_i32, %c0_i32_0 : i32, i32
  }
  func.func @transform_9(%arg0: i32, %arg1: i32) -> (i32, i32) {
    %c0_i32 = arith.constant 0 : i32
    %c0_i32_0 = arith.constant 0 : i32
    %c0_i32_1 = arith.constant 0 : i32
    return %c0_i32, %c0_i32_0 : i32, i32
  }
  func.func @transform_10(%arg0: i32, %arg1: i32) -> (i32, i32) {
    %c0_i32 = arith.constant 0 : i32
    %c0_i32_0 = arith.constant 0 : i32
    %c0_i32_1 = arith.constant 0 : i32
    return %c0_i32, %c0_i32_0 : i32, i32
  }
  func.func @transform_11(%arg0: i32, %arg1: i32) -> (i32, i32) {
    %c0_i32 = arith.constant 0 : i32
    %c0_i32_0 = arith.constant 0 : i32
    %c0_i32_1 = arith.constant 0 : i32
    return %c0_i32, %c0_i32_0 : i32, i32
  }
  func.func @transform_12(%arg0: i32, %arg1: i32) -> (i32, i32, i32) {
    %c0_i32 = arith.constant 0 : i32
    %c0_i32_0 = arith.constant 0 : i32
    return %arg0, %arg1, %c0_i32 : i32, i32, i32
  }
}

</mosaic_0001>

<llo_original>
// kernel: gpt_forward.5
$region0: #{gpt_forward.5}
  #allocation0 [shape = 'u32[]', space=smem, size = 0x4, offset = 0x4, fixed_abs, tag = 'smem constant byte address 0x4 - core index']
  #allocation1 [shape = 'u32[144,128]{1,0:T(1,128)}', space=vmem, size = 0x12000, scoped, tag = 'internal scratch']
  %s0 = inlined_call_operand.vmem [shape: f32[2,8,32], index: 0, kind: input, shape index: {}]
  %s1 = inlined_call_operand.vmem [shape: f32[1,32], index: 1, kind: input, shape index: {}]
  %s2 = inlined_call_operand.vmem [shape: f32[1,32], index: 2, kind: input, shape index: {}]
  %s3 = inlined_call_operand.vmem [shape: bf16[32,96], index: 3, kind: input, shape index: {}]
  %s4 = inlined_call_operand.vmem [shape: f32[1,96], index: 4, kind: input, shape index: {}]
  %s5 = inlined_call_operand.vmem [shape: bf16[2,8,32], index: 5, kind: output, shape index: {0}]
  %s6 = inlined_call_operand.vmem [shape: bf16[2,8,32], index: 6, kind: output, shape index: {1}]
  %s7 = inlined_call_operand.vmem [shape: bf16[2,8,32], index: 7, kind: output, shape index: {2}]
  %8 = xla_tuple %s5, %s6, %s7
  %s9 = sld [smem:[#allocation0]]
  $region69: #{gpt_forward.5} parent=0
    _
  %s11 = ssub.s32 1, %s9
  %s12 = scalar_select 0, %s11, %s9
  loop: start=0, step=1, limit=4
  $region2: #{gpt_forward.5} parent=0 // loop_pre_header
    _
  $region3: #{gpt_forward.5} parent=0 // loop_header
    %s14 = sphi 0, %s18
    %p15 = scmp.ge.s32.totalorder %s14, 4
    %s21 = sphi 0, %s33
    %s22 = sphi 0, %s29
    %s23 = sphi 0, %s21
    %s24 = sphi 0, %s22
    %s25 = sphi 0, %s23
    %s26 = sphi 0, %s24
    %s38 = sphi 0, %s40
    %s41 = sphi 0, %s38
    %s42 = sphi 0, %s41
    %s58 = sphi 0, %s42
    %s62 = sphi 0, %s62
    %s64 = sphi 0, %s62
    %s65 = sphi 0, %s64
    %s79 = sphi 0, %s65
    %s83 = sphi 0, %s83
    %s85 = sphi 0, %s83
    %s86 = sphi 0, %s85
    %s100 = sphi 0, %s86
    %s104 = sphi 0, %s104
    %s106 = sphi 0, %s104
    %s107 = sphi 0, %s106
    %s121 = sphi 0, %s107
    %s125 = sphi 0, %s125
    %s127 = sphi 0, %s125
    %s128 = sphi 0, %s127
    %s142 = sphi 0, %s128
    %s150 = sphi 0, %s152
    %s153 = sphi 0, %s150
    %s154 = sphi 0, %s153
    %s170 = sphi 0, %s154
    %s178 = sphi 0, %s180
    %s181 = sphi 0, %s178
    %s182 = sphi 0, %s181
    %s198 = sphi 0, %s182
    %s206 = sphi 0, %s208
    %s209 = sphi 0, %s206
    %s210 = sphi 0, %s209
    %s226 = sphi 0, %s210
  $region4: #{gpt_forward.5} parent=0 // loop_header_branch
    %17 = sbr.rel (%p15) target = $region8
  $region5: #{gpt_forward.5} parent=0 // loop_body
    %s19 = ssub.s32 %s14, 1
    %s20 = ssub.s32 %s14, 2
    %s27 = sadd.s32 1, %s22
    %p28 = scmp.ge.s32.totalorder %s27, 1
    %s29 = scalar_select %p28, 0, %s27
    %s30 = sadd.s32 1, %s21
    %s31 = scalar_select %p28, %s30, %s21
    %p32 = scmp.ge.s32.totalorder %s31, 2
    %s33 = scalar_select %p32, 0, %s31
    %s34 = ssub.s32 %s21, %s33
    %s35 = ssub.s32 %s22, %s29
    %s36 = sor.u32 %s34, %s35
    %p37 = scmp.eq.s32.totalorder %s36, 0
    %s39 = sadd.s32 %s38, 1
    %s40 = scalar_select %p37, %s38, %s39
    %p43 = pneg %p37
    %p44 = scmp.eq.s32.totalorder %s14, 1
    %p45 = por %p43, %p44
    %p46 = scmp.ne.s32.totalorder %s38, %s41
    %p47 = scmp.eq.s32.totalorder %s14, 0
    %p48 = por %p46, %p47
    %p49 = scmp.ne.s32.totalorder %s38, %s41
    %p50 = scmp.eq.s32.totalorder %s19, 1
    %p51 = por %p49, %p50
    %p52 = scmp.ne.s32.totalorder %s41, %s42
    %p53 = scmp.eq.s32.totalorder %s19, 0
    %p54 = por %p52, %p53
    %p55 = scmp.ne.s32.totalorder %s41, %s42
    %p56 = scmp.eq.s32.totalorder %s20, 1
    %p57 = por %p55, %p56
    %p59 = scmp.ne.s32.totalorder %s42, %s58
    %p60 = scmp.eq.s32.totalorder %s20, 0
    %p61 = por %p59, %p60
    %s63 = sadd.s32 %s62, 1
    %p66 = scmp.eq.s32.totalorder %s14, 1
    %p67 = scmp.ne.s32.totalorder %s62, %s64
    %p68 = scmp.eq.s32.totalorder %s14, 0
    %p69 = por %p67, %p68
    %p70 = scmp.ne.s32.totalorder %s62, %s64
    %p71 = scmp.eq.s32.totalorder %s19, 1
    %p72 = por %p70, %p71
    %p73 = scmp.ne.s32.totalorder %s64, %s65
    %p74 = scmp.eq.s32.totalorder %s19, 0
    %p75 = por %p73, %p74
    %p76 = scmp.ne.s32.totalorder %s64, %s65
    %p77 = scmp.eq.s32.totalorder %s20, 1
    %p78 = por %p76, %p77
    %p80 = scmp.ne.s32.totalorder %s65, %s79
    %p81 = scmp.eq.s32.totalorder %s20, 0
    %p82 = por %p80, %p81
    %s84 = sadd.s32 %s83, 1
    %p87 = scmp.eq.s32.totalorder %s14, 1
    %p88 = scmp.ne.s32.totalorder %s83, %s85
    %p89 = scmp.eq.s32.totalorder %s14, 0
    %p90 = por %p88, %p89
    %p91 = scmp.ne.s32.totalorder %s83, %s85
    %p92 = scmp.eq.s32.totalorder %s19, 1
    %p93 = por %p91, %p92
    %p94 = scmp.ne.s32.totalorder %s85, %s86
    %p95 = scmp.eq.s32.totalorder %s19, 0
    %p96 = por %p94, %p95
    %p97 = scmp.ne.s32.totalorder %s85, %s86
    %p98 = scmp.eq.s32.totalorder %s20, 1
    %p99 = por %p97, %p98
    %p101 = scmp.ne.s32.totalorder %s86, %s100
    %p102 = scmp.eq.s32.totalorder %s20, 0
    %p103 = por %p101, %p102
    %s105 = sadd.s32 %s104, 1
    %p108 = scmp.eq.s32.totalorder %s14, 1
    %p109 = scmp.ne.s32.totalorder %s104, %s106
    %p110 = scmp.eq.s32.totalorder %s14, 0
    %p111 = por %p109, %p110
    %p112 = scmp.ne.s32.totalorder %s104, %s106
    %p113 = scmp.eq.s32.totalorder %s19, 1
    %p114 = por %p112, %p113
    %p115 = scmp.ne.s32.totalorder %s106, %s107
    %p116 = scmp.eq.s32.totalorder %s19, 0
    %p117 = por %p115, %p116
    %p118 = scmp.ne.s32.totalorder %s106, %s107
    %p119 = scmp.eq.s32.totalorder %s20, 1
    %p120 = por %p118, %p119
    %p122 = scmp.ne.s32.totalorder %s107, %s121
    %p123 = scmp.eq.s32.totalorder %s20, 0
    %p124 = por %p122, %p123
    %s126 = sadd.s32 %s125, 1
    %p129 = scmp.eq.s32.totalorder %s14, 1
    %p130 = scmp.ne.s32.totalorder %s125, %s127
    %p131 = scmp.eq.s32.totalorder %s14, 0
    %p132 = por %p130, %p131
    %p133 = scmp.ne.s32.totalorder %s125, %s127
    %p134 = scmp.eq.s32.totalorder %s19, 1
    %p135 = por %p133, %p134
    %p136 = scmp.ne.s32.totalorder %s127, %s128
    %p137 = scmp.eq.s32.totalorder %s19, 0
    %p138 = por %p136, %p137
    %p139 = scmp.ne.s32.totalorder %s127, %s128
    %p140 = scmp.eq.s32.totalorder %s20, 1
    %p141 = por %p139, %p140
    %p143 = scmp.ne.s32.totalorder %s128, %s142
    %p144 = scmp.eq.s32.totalorder %s20, 0
    %p145 = por %p143, %p144
    %s146 = ssub.s32 %s21, %s33
    %s147 = ssub.s32 %s22, %s29
    %s148 = sor.u32 %s146, %s147
    %p149 = scmp.eq.s32.totalorder %s148, 0
    %s151 = sadd.s32 %s150, 1
    %s152 = scalar_select %p149, %s150, %s151
    %p155 = pneg %p149
    %p156 = scmp.eq.s32.totalorder %s14, 1
    %p157 = por %p155, %p156
    %p158 = scmp.ne.s32.totalorder %s150, %s153
    %p159 = scmp.eq.s32.totalorder %s14, 0
    %p160 = por %p158, %p159
    %p161 = scmp.ne.s32.totalorder %s150, %s153
    %p162 = scmp.eq.s32.totalorder %s19, 1
    %p163 = por %p161, %p162
    %p164 = scmp.ne.s32.totalorder %s153, %s154
    %p165 = scmp.eq.s32.totalorder %s19, 0
    %p166 = por %p164, %p165
    %p167 = scmp.ne.s32.totalorder %s153, %s154
    %p168 = scmp.eq.s32.totalorder %s20, 1
    %p169 = por %p167, %p168
    %p171 = scmp.ne.s32.totalorder %s154, %s170
    %p172 = scmp.eq.s32.totalorder %s20, 0
    %p173 = por %p171, %p172
    %s174 = ssub.s32 %s21, %s33
    %s175 = ssub.s32 %s22, %s29
    %s176 = sor.u32 %s174, %s175
    %p177 = scmp.eq.s32.totalorder %s176, 0
    %s179 = sadd.s32 %s178, 1
    %s180 = scalar_select %p177, %s178, %s179
    %p183 = pneg %p177
    %p184 = scmp.eq.s32.totalorder %s14, 1
    %p185 = por %p183, %p184
    %p186 = scmp.ne.s32.totalorder %s178, %s181
    %p187 = scmp.eq.s32.totalorder %s14, 0
    %p188 = por %p186, %p187
    %p189 = scmp.ne.s32.totalorder %s178, %s181
    %p190 = scmp.eq.s32.totalorder %s19, 1
    %p191 = por %p189, %p190
    %p192 = scmp.ne.s32.totalorder %s181, %s182
    %p193 = scmp.eq.s32.totalorder %s19, 0
    %p194 = por %p192, %p193
    %p195 = scmp.ne.s32.totalorder %s181, %s182
    %p196 = scmp.eq.s32.totalorder %s20, 1
    %p197 = por %p195, %p196
    %p199 = scmp.ne.s32.totalorder %s182, %s198
    %p200 = scmp.eq.s32.totalorder %s20, 0
    %p201 = por %p199, %p200
    %s202 = ssub.s32 %s21, %s33
    %s203 = ssub.s32 %s22, %s29
    %s204 = sor.u32 %s202, %s203
    %p205 = scmp.eq.s32.totalorder %s204, 0
    %s207 = sadd.s32 %s206, 1
    %s208 = scalar_select %p205, %s206, %s207
    %p211 = pneg %p205
    %p212 = scmp.eq.s32.totalorder %s14, 1
    %p213 = por %p211, %p212
    %p214 = scmp.ne.s32.totalorder %s206, %s209
    %p215 = scmp.eq.s32.totalorder %s14, 0
    %p216 = por %p214, %p215
    %p217 = scmp.ne.s32.totalorder %s206, %s209
    %p218 = scmp.eq.s32.totalorder %s19, 1
    %p219 = por %p217, %p218
    %p220 = scmp.ne.s32.totalorder %s209, %s210
    %p221 = scmp.eq.s32.totalorder %s19, 0
    %p222 = por %p220, %p221
    %p223 = scmp.ne.s32.totalorder %s209, %s210
    %p224 = scmp.eq.s32.totalorder %s20, 1
    %p225 = por %p223, %p224
    %p227 = scmp.ne.s32.totalorder %s210, %s226
    %p228 = scmp.eq.s32.totalorder %s20, 0
    %p229 = por %p227, %p228
    %p230 = scmp.le.s32.totalorder 1, %s14
    %p231 = scmp.lt.s32.totalorder %s14, 3
    %p232 = pnand %p230, %p231
    %p233 = pneg %p232
    // Predicated region
    $region9: #{gpt_forward.5} parent=5 // pred_check
      _
    $region10: #{gpt_forward.5} parent=5 // pred_check_branch
      %235 = sbr.rel (%p232) target = $region12
    $region11: #{gpt_forward.5} parent=5 // pred_region
      %s236 = ssub.s32 %s14, 1
      // Predicated region
      $region13: #{gpt_forward.5} parent=11 // pred_check
        %p237 = pneg %p75
      $region14: #{gpt_forward.5} parent=11 // pred_check_branch
        %239 = sbr.rel (%p237) target = $region16
      $region15: #{gpt_forward.5} parent=11 // pred_region
        _
      $region16: #{gpt_forward.5} parent=11 // pred_fallthru
        _
      // Predicated region
      $region17: #{gpt_forward.5} parent=11 // pred_check
        %p240 = pneg %p96
      $region18: #{gpt_forward.5} parent=11 // pred_check_branch
        %242 = sbr.rel (%p240) target = $region20
      $region19: #{gpt_forward.5} parent=11 // pred_region
        _
      $region20: #{gpt_forward.5} parent=11 // pred_fallthru
        _
      // Predicated region
      $region21: #{gpt_forward.5} parent=11 // pred_check
        %p243 = pneg %p117
      $region22: #{gpt_forward.5} parent=11 // pred_check_branch
        %245 = sbr.rel (%p243) target = $region24
      $region23: #{gpt_forward.5} parent=11 // pred_region
        _
      $region24: #{gpt_forward.5} parent=11 // pred_fallthru
        _
      // Predicated region
      $region25: #{gpt_forward.5} parent=11 // pred_check
        %p246 = pneg %p138
      $region26: #{gpt_forward.5} parent=11 // pred_check_branch
        %248 = sbr.rel (%p246) target = $region28
      $region27: #{gpt_forward.5} parent=11 // pred_region
        _
      $region28: #{gpt_forward.5} parent=11 // pred_fallthru
        _
    $region12: #{gpt_forward.5} parent=5 // pred_fallthru
      _
    %p249 = scmp.lt.s32.totalorder %s14, 2
    // Predicated region
    $region29: #{gpt_forward.5} parent=5 // pred_check
      %p250 = pneg %p249
    $region30: #{gpt_forward.5} parent=5 // pred_check_branch
      %252 = sbr.rel (%p250) target = $region32
    $region31: #{gpt_forward.5} parent=5 // pred_region
      // Predicated region
      $region33: #{gpt_forward.5} parent=31 // pred_check
        %p253 = pneg %p48
      $region34: #{gpt_forward.5} parent=31 // pred_check_branch
        %255 = sbr.rel (%p253) target = $region36
      $region35: #{gpt_forward.5} parent=31 // pred_region
        %p256 = scmp.lt.s32.totalorder %s21, 1
        %s257 = scalar_select %p256, %s21, 1
        %p258 = scmp.lt.s32.totalorder %s22, 0
        %s259 = scalar_select %p258, %s22, 0
        %s260 = sadd.s32 %s259, %s257
        %s261 = smul.addr %s260, 8
        %s262 = scalar_lea.vmem %s0, %s261
      $region36: #{gpt_forward.5} parent=31 // pred_fallthru
        _
    $region32: #{gpt_forward.5} parent=5 // pred_fallthru
      _
    %p263 = scmp.le.s32.totalorder 1, %s14
    %p264 = scmp.lt.s32.totalorder %s14, 3
    %p265 = pnand %p263, %p264
    %p266 = pneg %p265
    // Predicated region
    $region37: #{gpt_forward.5} parent=5 // pred_check
      _
    $region38: #{gpt_forward.5} parent=5 // pred_check_branch
      %268 = sbr.rel (%p265) target = $region40
    $region39: #{gpt_forward.5} parent=5 // pred_region
      %s269 = ssub.s32 %s14, 1
      %p270 = scmp.lt.s32.totalorder %s23, 1
      %s271 = scalar_select %p270, %s23, 1
      %p272 = scmp.lt.s32.totalorder %s24, 0
      %s273 = scalar_select %p272, %s24, 0
      %s274 = sadd.s32 %s273, %s271
      %s275 = smul.addr %s274, 8
      %s276 = scalar_lea.vmem %s0, %s275
      %p277 = pneg %p54
      %p278 = pneg %p51
      %p279 = pneg %p75
      %p280 = pneg %p72
      %p281 = pneg %p96
      %p282 = pneg %p93
      %p283 = pneg %p117
      %p284 = pneg %p114
      %p285 = pneg %p138
      %p286 = pneg %p135
      %p287 = pneg %p166
      %p288 = pneg %p163
      %p289 = scmp.lt.s32.totalorder %s23, 1
      %s290 = scalar_select %p289, %s23, 1
      %p291 = scmp.lt.s32.totalorder %s24, 0
      %s292 = scalar_select %p291, %s24, 0
      %s293 = sadd.s32 %s292, %s290
      %s294 = smul.addr %s293, 4
      %s295 = scalar_lea.vmem %s5, %s294
      %p296 = pneg %p194
      %p297 = pneg %p191
      %p298 = scmp.lt.s32.totalorder %s23, 1
      %s299 = scalar_select %p298, %s23, 1
      %p300 = scmp.lt.s32.totalorder %s24, 0
      %s301 = scalar_select %p300, %s24, 0
      %s302 = sadd.s32 %s301, %s299
      %s303 = smul.addr %s302, 4
      %s304 = scalar_lea.vmem %s6, %s303
      %p305 = pneg %p222
      %p306 = pneg %p219
      %p307 = scmp.lt.s32.totalorder %s23, 1
      %s308 = scalar_select %p307, %s23, 1
      %p309 = scmp.lt.s32.totalorder %s24, 0
      %s310 = scalar_select %p309, %s24, 0
      %s311 = sadd.s32 %s310, %s308
      %s312 = smul.addr %s311, 4
      %s313 = scalar_lea.vmem %s7, %s312
      %p314 = scmp.lt.s32.totalorder %s23, 1
      %s315 = scalar_select %p314, %s23, 1
      %p316 = scmp.lt.s32.totalorder %s24, 0
      %s317 = scalar_select %p316, %s24, 0
      %s318 = sadd.s32 %s317, %s315
      %s319 = smul.addr %s318, 8
      %s320 = scalar_lea.vmem %s0, %s319
      %p321 = scmp.lt.s32.totalorder %s23, 1
      %s322 = scalar_select %p321, %s23, 1
      %p323 = scmp.lt.s32.totalorder %s24, 0
      %s324 = scalar_select %p323, %s24, 0
      %s325 = sadd.s32 %s324, %s322
      %s326 = smul.addr %s325, 4
      %s327 = scalar_lea.vmem %s5, %s326
      %p328 = scmp.lt.s32.totalorder %s23, 1
      %s329 = scalar_select %p328, %s23, 1
      %p330 = scmp.lt.s32.totalorder %s24, 0
      %s331 = scalar_select %p330, %s24, 0
      %s332 = sadd.s32 %s331, %s329
      %s333 = smul.addr %s332, 4
      %s334 = scalar_lea.vmem %s6, %s333
      %p335 = scmp.lt.s32.totalorder %s23, 1
      %s336 = scalar_select %p335, %s23, 1
      %p337 = scmp.lt.s32.totalorder %s24, 0
      %s338 = scalar_select %p337, %s24, 0
      %s339 = sadd.s32 %s338, %s336
      %s340 = smul.addr %s339, 4
      %s341 = scalar_lea.vmem %s7, %s340
      %v343 = vld [vmem:[%s320] sm:$0xff]
      %v344 = vld [vmem:[%s1] sm:$0x1]
      %v345 = vld [vmem:[%s2] sm:$0x1]
      %vm346 = vcmask 261120
      %v347 = vsel %vm346, %v343, 0.0
      %348 = vadd.xlane.f32.xlu0 %v347
      %v349 = vpop.xlane.xlu0 %348
      %v350 = vrcp.pop 32.0
      %v351 = vmul.f32 %v349, %v350
      %v352 = vsub.f32 %v343, %v351
      %v353 = vmul.f32 %v352, %v352
      %v354 = vsel %vm346, %v353, 0.0
      %355 = vadd.xlane.f32.xlu0 %v354
      %v356 = vpop.xlane.xlu0 %355
      %v357 = vmul.f32 %v356, %v350
      %v358 = vadd.f32 %v357, 1e-05
      %v359 = vrsqrt.pop %v358
      %v360 = vmul.f32 %v352, %v359
      %v362 = vlaneseq
      %v363 = vshrl.u32 %v362, 7
      %v364 = vsub.s32 0, %v363
      %v365 = vrot.slane %v344, %v364
      %v367 = vmul.f32 %v360, %v365
      %v369 = vlaneseq
      %v370 = vshrl.u32 %v369, 7
      %v371 = vsub.s32 0, %v370
      %v372 = vrot.slane %v345, %v371
      %v374 = vadd.f32 %v367, %v372
      %v375 = vpack.c.bf16 %v374, %v374
      %v376 = vld [vmem:[%s3] sm:$0xf]
      %v377 = vld [vmem:[%s3 + $0x4] sm:$0xf]
      %v378 = vld [vmem:[%s3 + $0x8] sm:$0xf]
      %v379 = vld [vmem:[%s3 + $0xc] sm:$0xf]
      %v380 = vld [vmem:[%s4] sm:$0x1]
      %v382 = vlaneseq
      %v383 = vshrl.u32 %v382, 7
      %v384 = vsub.s32 0, %v383
      %v385 = vrot.slane %v380, %v384
      %v391 = vunpack.c.l.b16 %v376
      %v392 = vunpack.c.l.b16 %v377
      %v393 = vunpack.c.l.b16 %v378
      %v394 = vunpack.c.l.b16 %v379
      %v395 = vpack.c.b16 %v392, %v391
      %v396 = vpack.c.b16 %v394, %v393
      %v400 = vsel %vm346, %v375, 0
      %402 = vmatprep.subr.bf16.mxu0 0
      %403 = vmatpush1.bf16.msra.mxu0 0
      %404 = vmatprep.subr.bf16.mxu0 0
      %405 = vmatpush1.bf16.msra.mxu0 0
      %406 = vmatprep.subr.bf16.mxu0 0
      %407 = vmatpush1.bf16.msra.mxu0 0
      %408 = vmatprep.subr.bf16.mxu0 0
      %409 = vmatpush1.bf16.msra.mxu0 0
      %410 = vmatprep.subr.bf16.mxu0 0
      %411 = vmatpush1.bf16.msra.mxu0 0
      %412 = vmatprep.subr.bf16.mxu0 0
      %413 = vmatpush1.bf16.msra.mxu0 0
      %414 = vmatprep.subr.bf16.mxu0 0
      %415 = vmatpush1.bf16.msra.mxu0 %v396
      %416 = vmatprep.subr.bf16.mxu0 0
      %417 = vmatpush1.bf16.msra.mxu0 %v395
      %418 = vmatprep.subr.bf16.mxu0 0
      %419 = vmatpush2.bf16.msra.mxu0 0
      %420 = vmatprep.subr.bf16.mxu0 0
      %421 = vmatpush2.bf16.msra.mxu0 0
      %422 = vmatprep.subr.bf16.mxu0 0
      %423 = vmatpush2.bf16.msra.mxu0 0
      %424 = vmatprep.subr.bf16.mxu0 0
      %425 = vmatpush2.bf16.msra.mxu0 0
      %426 = vmatprep.subr.bf16.mxu0 0
      %427 = vmatpush2.bf16.msra.mxu0 0
      %428 = vmatprep.subr.bf16.mxu0 0
      %429 = vmatpush2.bf16.msra.mxu0 0
      %430 = vmatprep.subr.bf16.mxu0 0
      %431 = vmatpush2.bf16.msra.mxu0 0
      %432 = vmatprep.subr.bf16.mxu0 0
      %433 = vmatpush2.bf16.msra.mxu0 0
      %434 = vmatprep.mubr.bf16.mxu0 0
      %435 = vmatmul.mubr.bf16.gmra.mxu0 %v400
      %v436 = vpop.f32.mrf.mxu0
      %v437 = vadd.f32 %v385, %v436
      %v438 = vpop.f32.mrf.mxu0
      %v439 = vpop.f32.mrf.mxu0
      %v440 = vpop.f32.mrf.mxu0
      %441 = vdwg.mxu0
      %v442 = vmul.f32 %v437, 0.25
      %v443 = vpack.c.bf16 %v442, %v442
      %vm444 = vcmask 257024
      %445 = vst.msk [vmem:[%s327] sm:$0xf] %vm444, %v443
      %v446 = vpack.c.bf16 %v437, %v437
      %v448 = vunpack.c.l.b16 %v446
      %v449 = vpack.c.b16 %v448, %v448
      %450 = vrot.lane.b32.xlu0 %v449, 96
      %v451 = vpop.permute.xlu0 %450
      %453 = vst.msk [vmem:[%s334] sm:$0xf] %vm444, %v451
      %454 = vrot.lane.b32.xlu0 %v449, 64
      %v455 = vpop.permute.xlu0 %454
      %457 = vst.msk [vmem:[%s341] sm:$0xf] %vm444, %v455
      %p458 = scmp.lt.s32.totalorder %s23, 1
      %s459 = scalar_select %p458, %s23, 1
      %p460 = scmp.lt.s32.totalorder %s24, 0
      %s461 = scalar_select %p460, %s24, 0
      %s462 = sadd.s32 %s461, %s459
      %s463 = smul.addr %s462, 4
      %s464 = scalar_lea.vmem %s5, %s463
      %p465 = scmp.lt.s32.totalorder %s23, 1
      %s466 = scalar_select %p465, %s23, 1
      %p467 = scmp.lt.s32.totalorder %s24, 0
      %s468 = scalar_select %p467, %s24, 0
      %s469 = sadd.s32 %s468, %s466
      %s470 = smul.addr %s469, 4
      %s471 = scalar_lea.vmem %s6, %s470
      %p472 = scmp.lt.s32.totalorder %s23, 1
      %s473 = scalar_select %p472, %s23, 1
      %p474 = scmp.lt.s32.totalorder %s24, 0
      %s475 = scalar_select %p474, %s24, 0
      %s476 = sadd.s32 %s475, %s473
      %s477 = smul.addr %s476, 4
      %s478 = scalar_lea.vmem %s7, %s477
      // Predicated region
      $region41: #{gpt_forward.5} parent=39 // pred_check
        %p479 = pneg %p163
      $region42: #{gpt_forward.5} parent=39 // pred_check_branch
        %481 = sbr.rel (%p479) target = $region44
      $region43: #{gpt_forward.5} parent=39 // pred_region
        _
      $region44: #{gpt_forward.5} parent=39 // pred_fallthru
        _
      // Predicated region
      $region45: #{gpt_forward.5} parent=39 // pred_check
        %p482 = pneg %p191
      $region46: #{gpt_forward.5} parent=39 // pred_check_branch
        %484 = sbr.rel (%p482) target = $region48
      $region47: #{gpt_forward.5} parent=39 // pred_region
        _
      $region48: #{gpt_forward.5} parent=39 // pred_fallthru
        _
      // Predicated region
      $region49: #{gpt_forward.5} parent=39 // pred_check
        %p485 = pneg %p219
      $region50: #{gpt_forward.5} parent=39 // pred_check_branch
        %487 = sbr.rel (%p485) target = $region52
      $region51: #{gpt_forward.5} parent=39 // pred_region
        _
      $region52: #{gpt_forward.5} parent=39 // pred_fallthru
        _
    $region40: #{gpt_forward.5} parent=5 // pred_fallthru
      _
    %p488 = scmp.le.s32.totalorder 2, %s14
    // Predicated region
    $region53: #{gpt_forward.5} parent=5 // pred_check
      %p489 = pneg %p488
    $region54: #{gpt_forward.5} parent=5 // pred_check_branch
      %491 = sbr.rel (%p489) target = $region56
    $region55: #{gpt_forward.5} parent=5 // pred_region
      %s492 = ssub.s32 %s14, 2
      // Predicated region
      $region57: #{gpt_forward.5} parent=55 // pred_check
        %p493 = pneg %p169
      $region58: #{gpt_forward.5} parent=55 // pred_check_branch
        %495 = sbr.rel (%p493) target = $region60
      $region59: #{gpt_forward.5} parent=55 // pred_region
        %p496 = scmp.lt.s32.totalorder %s25, 1
        %s497 = scalar_select %p496, %s25, 1
        %p498 = scmp.lt.s32.totalorder %s26, 0
        %s499 = scalar_select %p498, %s26, 0
        %s500 = sadd.s32 %s499, %s497
        %s501 = smul.addr %s500, 4
        %s502 = scalar_lea.vmem %s5, %s501
      $region60: #{gpt_forward.5} parent=55 // pred_fallthru
        _
      // Predicated region
      $region61: #{gpt_forward.5} parent=55 // pred_check
        %p503 = pneg %p197
      $region62: #{gpt_forward.5} parent=55 // pred_check_branch
        %505 = sbr.rel (%p503) target = $region64
      $region63: #{gpt_forward.5} parent=55 // pred_region
        %p506 = scmp.lt.s32.totalorder %s25, 1
        %s507 = scalar_select %p506, %s25, 1
        %p508 = scmp.lt.s32.totalorder %s26, 0
        %s509 = scalar_select %p508, %s26, 0
        %s510 = sadd.s32 %s509, %s507
        %s511 = smul.addr %s510, 4
        %s512 = scalar_lea.vmem %s6, %s511
      $region64: #{gpt_forward.5} parent=55 // pred_fallthru
        _
      // Predicated region
      $region65: #{gpt_forward.5} parent=55 // pred_check
        %p513 = pneg %p225
      $region66: #{gpt_forward.5} parent=55 // pred_check_branch
        %515 = sbr.rel (%p513) target = $region68
      $region67: #{gpt_forward.5} parent=55 // pred_region
        %p516 = scmp.lt.s32.totalorder %s25, 1
        %s517 = scalar_select %p516, %s25, 1
        %p518 = scmp.lt.s32.totalorder %s26, 0
        %s519 = scalar_select %p518, %s26, 0
        %s520 = sadd.s32 %s519, %s517
        %s521 = smul.addr %s520, 4
        %s522 = scalar_lea.vmem %s7, %s521
      $region68: #{gpt_forward.5} parent=55 // pred_fallthru
        _
    $region56: #{gpt_forward.5} parent=5 // pred_fallthru
      _
  $region6: #{gpt_forward.5} parent=0 // loop_footer
    %s18 = sadd.s32 1, %s14
  $region7: #{gpt_forward.5} parent=0 // loop_footer_branch
    %13 = sbr.rel target = $region3
  $region8: #{gpt_forward.5} parent=0 // loop_exit
    _

// kernel: gpt_forward.9
$region0: #{gpt_forward.9}
  #allocation0 [shape = 'u32[]', space=smem, size = 0x4, offset = 0x4, fixed_abs, tag = 'smem constant byte address 0x4 - core index']
  #allocation1 [shape = 'u32[144,128]{1,0:T(1,128)}', space=vmem, size = 0x12000, scoped, tag = 'internal scratch']
  #allocation2 [shape = 'bf16[8,32]{1,0:T(8,128)(2,1)}', space=vmem, size = 0x800, scoped, tag = 'scratch operand']
  %s0 = inlined_call_operand.vmem [shape: f32[2,8,32], index: 0, kind: input, shape index: {}]
  %s1 = inlined_call_operand.vmem [shape: f32[1,32], index: 1, kind: input, shape index: {}]
  %s2 = inlined_call_operand.vmem [shape: f32[1,32], index: 2, kind: input, shape index: {}]
  %s3 = inlined_call_operand.vmem [shape: bf16[256,32], index: 3, kind: input, shape index: {}]
  %s4 = inlined_call_operand.vmem [shape: f32[2,8,256], index: 4, kind: output, shape index: {}]
  %s5 = sld [smem:[#allocation0]]
  $region53: #{gpt_forward.9} parent=0
    _
  %s7 = ssub.s32 1, %s5
  %s8 = scalar_select 0, %s7, %s5
  loop: start=0, step=1, limit=4
  $region2: #{gpt_forward.9} parent=0 // loop_pre_header
    _
  $region3: #{gpt_forward.9} parent=0 // loop_header
    %s10 = sphi 0, %s14
    %p11 = scmp.ge.s32.totalorder %s10, 4
    %s17 = sphi 0, %s29
    %s18 = sphi 0, %s25
    %s19 = sphi 0, %s17
    %s20 = sphi 0, %s18
    %s21 = sphi 0, %s19
    %s22 = sphi 0, %s20
    %s32 = sphi 0, %s34
    %s35 = sphi 0, %s32
    %s36 = sphi 0, %s35
    %s52 = sphi 0, %s36
    %s56 = sphi 0, %s56
    %s58 = sphi 0, %s56
    %s59 = sphi 0, %s58
    %s73 = sphi 0, %s59
    %s77 = sphi 0, %s77
    %s79 = sphi 0, %s77
    %s80 = sphi 0, %s79
    %s94 = sphi 0, %s80
    %s100 = sphi 0, %s102
    %s103 = sphi 0, %s100
    %s104 = sphi 0, %s103
    %s120 = sphi 0, %s104
    %s128 = sphi 0, %s130
    %s131 = sphi 0, %s128
    %s132 = sphi 0, %s131
    %s148 = sphi 0, %s132
  $region4: #{gpt_forward.9} parent=0 // loop_header_branch
    %13 = sbr.rel (%p11) target = $region8
  $region5: #{gpt_forward.9} parent=0 // loop_body
    %s15 = ssub.s32 %s10, 1
    %s16 = ssub.s32 %s10, 2
    %s23 = sadd.s32 1, %s18
    %p24 = scmp.ge.s32.totalorder %s23, 1
    %s25 = scalar_select %p24, 0, %s23
    %s26 = sadd.s32 1, %s17
    %s27 = scalar_select %p24, %s26, %s17
    %p28 = scmp.ge.s32.totalorder %s27, 2
    %s29 = scalar_select %p28, 0, %s27
    %s30 = ssub.s32 %s17, %s29
    %p31 = scmp.eq.s32.totalorder %s30, 0
    %s33 = sadd.s32 %s32, 1
    %s34 = scalar_select %p31, %s32, %s33
    %p37 = pneg %p31
    %p38 = scmp.eq.s32.totalorder %s10, 1
    %p39 = por %p37, %p38
    %p40 = scmp.ne.s32.totalorder %s32, %s35
    %p41 = scmp.eq.s32.totalorder %s10, 0
    %p42 = por %p40, %p41
    %p43 = scmp.ne.s32.totalorder %s32, %s35
    %p44 = scmp.eq.s32.totalorder %s15, 1
    %p45 = por %p43, %p44
    %p46 = scmp.ne.s32.totalorder %s35, %s36
    %p47 = scmp.eq.s32.totalorder %s15, 0
    %p48 = por %p46, %p47
    %p49 = scmp.ne.s32.totalorder %s35, %s36
    %p50 = scmp.eq.s32.totalorder %s16, 1
    %p51 = por %p49, %p50
    %p53 = scmp.ne.s32.totalorder %s36, %s52
    %p54 = scmp.eq.s32.totalorder %s16, 0
    %p55 = por %p53, %p54
    %s57 = sadd.s32 %s56, 1
    %p60 = scmp.eq.s32.totalorder %s10, 1
    %p61 = scmp.ne.s32.totalorder %s56, %s58
    %p62 = scmp.eq.s32.totalorder %s10, 0
    %p63 = por %p61, %p62
    %p64 = scmp.ne.s32.totalorder %s56, %s58
    %p65 = scmp.eq.s32.totalorder %s15, 1
    %p66 = por %p64, %p65
    %p67 = scmp.ne.s32.totalorder %s58, %s59
    %p68 = scmp.eq.s32.totalorder %s15, 0
    %p69 = por %p67, %p68
    %p70 = scmp.ne.s32.totalorder %s58, %s59
    %p71 = scmp.eq.s32.totalorder %s16, 1
    %p72 = por %p70, %p71
    %p74 = scmp.ne.s32.totalorder %s59, %s73
    %p75 = scmp.eq.s32.totalorder %s16, 0
    %p76 = por %p74, %p75
    %s78 = sadd.s32 %s77, 1
    %p81 = scmp.eq.s32.totalorder %s10, 1
    %p82 = scmp.ne.s32.totalorder %s77, %s79
    %p83 = scmp.eq.s32.totalorder %s10, 0
    %p84 = por %p82, %p83
    %p85 = scmp.ne.s32.totalorder %s77, %s79
    %p86 = scmp.eq.s32.totalorder %s15, 1
    %p87 = por %p85, %p86
    %p88 = scmp.ne.s32.totalorder %s79, %s80
    %p89 = scmp.eq.s32.totalorder %s15, 0
    %p90 = por %p88, %p89
    %p91 = scmp.ne.s32.totalorder %s79, %s80
    %p92 = scmp.eq.s32.totalorder %s16, 1
    %p93 = por %p91, %p92
    %p95 = scmp.ne.s32.totalorder %s80, %s94
    %p96 = scmp.eq.s32.totalorder %s16, 0
    %p97 = por %p95, %p96
    %s98 = ssub.s32 %s18, %s25
    %p99 = scmp.eq.s32.totalorder %s98, 0
    %s101 = sadd.s32 %s100, 1
    %s102 = scalar_select %p99, %s100, %s101
    %p105 = pneg %p99
    %p106 = scmp.eq.s32.totalorder %s10, 1
    %p107 = por %p105, %p106
    %p108 = scmp.ne.s32.totalorder %s100, %s103
    %p109 = scmp.eq.s32.totalorder %s10, 0
    %p110 = por %p108, %p109
    %p111 = scmp.ne.s32.totalorder %s100, %s103
    %p112 = scmp.eq.s32.totalorder %s15, 1
    %p113 = por %p111, %p112
    %p114 = scmp.ne.s32.totalorder %s103, %s104
    %p115 = scmp.eq.s32.totalorder %s15, 0
    %p116 = por %p114, %p115
    %p117 = scmp.ne.s32.totalorder %s103, %s104
    %p118 = scmp.eq.s32.totalorder %s16, 1
    %p119 = por %p117, %p118
    %p121 = scmp.ne.s32.totalorder %s104, %s120
    %p122 = scmp.eq.s32.totalorder %s16, 0
    %p123 = por %p121, %p122
    %s124 = ssub.s32 %s17, %s29
    %s125 = ssub.s32 %s18, %s25
    %s126 = sor.u32 %s124, %s125
    %p127 = scmp.eq.s32.totalorder %s126, 0
    %s129 = sadd.s32 %s128, 1
    %s130 = scalar_select %p127, %s128, %s129
    %p133 = pneg %p127
    %p134 = scmp.eq.s32.totalorder %s10, 1
    %p135 = por %p133, %p134
    %p136 = scmp.ne.s32.totalorder %s128, %s131
    %p137 = scmp.eq.s32.totalorder %s10, 0
    %p138 = por %p136, %p137
    %p139 = scmp.ne.s32.totalorder %s128, %s131
    %p140 = scmp.eq.s32.totalorder %s15, 1
    %p141 = por %p139, %p140
    %p142 = scmp.ne.s32.totalorder %s131, %s132
    %p143 = scmp.eq.s32.totalorder %s15, 0
    %p144 = por %p142, %p143
    %p145 = scmp.ne.s32.totalorder %s131, %s132
    %p146 = scmp.eq.s32.totalorder %s16, 1
    %p147 = por %p145, %p146
    %p149 = scmp.ne.s32.totalorder %s132, %s148
    %p150 = scmp.eq.s32.totalorder %s16, 0
    %p151 = por %p149, %p150
    %p152 = scmp.le.s32.totalorder 1, %s10
    %p153 = scmp.lt.s32.totalorder %s10, 3
    %p154 = pnand %p152, %p153
    %p155 = pneg %p154
    // Predicated region
    $region9: #{gpt_forward.9} parent=5 // pred_check
      _
    $region10: #{gpt_forward.9} parent=5 // pred_check_branch
      %157 = sbr.rel (%p154) target = $region12
    $region11: #{gpt_forward.9} parent=5 // pred_region
      %s158 = ssub.s32 %s10, 1
      // Predicated region
      $region13: #{gpt_forward.9} parent=11 // pred_check
        %p159 = pneg %p69
      $region14: #{gpt_forward.9} parent=11 // pred_check_branch
        %161 = sbr.rel (%p159) target = $region16
      $region15: #{gpt_forward.9} parent=11 // pred_region
        _
      $region16: #{gpt_forward.9} parent=11 // pred_fallthru
        _
      // Predicated region
      $region17: #{gpt_forward.9} parent=11 // pred_check
        %p162 = pneg %p90
      $region18: #{gpt_forward.9} parent=11 // pred_check_branch
        %164 = sbr.rel (%p162) target = $region20
      $region19: #{gpt_forward.9} parent=11 // pred_region
        _
      $region20: #{gpt_forward.9} parent=11 // pred_fallthru
        _
      // Predicated region
      $region21: #{gpt_forward.9} parent=11 // pred_check
        %p165 = pneg %p116
      $region22: #{gpt_forward.9} parent=11 // pred_check_branch
        %167 = sbr.rel (%p165) target = $region24
      $region23: #{gpt_forward.9} parent=11 // pred_region
        %s168 = smul.u32 32, %s20
        %p169 = scmp.lt.s32.totalorder %s168, 31
        %s170 = scalar_select %p169, %s168, 31
        %s171 = smul.addr %s170, 4
        %s172 = scalar_lea.vmem %s3, %s171
        %s173 = smul.u32 32, %s20
      $region24: #{gpt_forward.9} parent=11 // pred_fallthru
        _
    $region12: #{gpt_forward.9} parent=5 // pred_fallthru
      _
    %p174 = scmp.lt.s32.totalorder %s10, 2
    // Predicated region
    $region25: #{gpt_forward.9} parent=5 // pred_check
      %p175 = pneg %p174
    $region26: #{gpt_forward.9} parent=5 // pred_check_branch
      %177 = sbr.rel (%p175) target = $region28
    $region27: #{gpt_forward.9} parent=5 // pred_region
      // Predicated region
      $region29: #{gpt_forward.9} parent=27 // pred_check
        %p178 = pneg %p42
      $region30: #{gpt_forward.9} parent=27 // pred_check_branch
        %180 = sbr.rel (%p178) target = $region32
      $region31: #{gpt_forward.9} parent=27 // pred_region
        %p181 = scmp.lt.s32.totalorder %s17, 1
        %s182 = scalar_select %p181, %s17, 1
        %s183 = smul.addr %s182, 8
        %s184 = scalar_lea.vmem %s0, %s183
      $region32: #{gpt_forward.9} parent=27 // pred_fallthru
        _
    $region28: #{gpt_forward.9} parent=5 // pred_fallthru
      _
    %p185 = scmp.le.s32.totalorder 1, %s10
    %p186 = scmp.lt.s32.totalorder %s10, 3
    %p187 = pnand %p185, %p186
    %p188 = pneg %p187
    // Predicated region
    $region33: #{gpt_forward.9} parent=5 // pred_check
      _
    $region34: #{gpt_forward.9} parent=5 // pred_check_branch
      %190 = sbr.rel (%p187) target = $region36
    $region35: #{gpt_forward.9} parent=5 // pred_region
      %s191 = ssub.s32 %s10, 1
      %p192 = scmp.lt.s32.totalorder %s19, 1
      %s193 = scalar_select %p192, %s19, 1
      %s194 = smul.addr %s193, 8
      %s195 = scalar_lea.vmem %s0, %s194
      %p196 = pneg %p48
      %p197 = pneg %p45
      %p198 = pneg %p69
      %p199 = pneg %p66
      %p200 = pneg %p90
      %p201 = pneg %p87
      %s202 = smul.u32 32, %s20
      %p203 = scmp.lt.s32.totalorder %s202, 31
      %s204 = scalar_select %p203, %s202, 31
      %s205 = smul.addr %s204, 4
      %s206 = scalar_lea.vmem %s3, %s205
      %p207 = pneg %p116
      %p208 = pneg %p113
      %p209 = pneg %p144
      %p210 = pneg %p141
      %s211 = smul.u32 2, %s20
      %p212 = scmp.lt.s32.totalorder %s19, 1
      %s213 = scalar_select %p212, %s19, 1
      %p214 = scmp.lt.s32.totalorder %s211, 1
      %s215 = scalar_select %p214, %s211, 1
      %s216 = smul.addr %s213, 2
      %s217 = sadd.s32 %s215, %s216
      %s218 = smul.addr %s217, 8
      %s219 = scalar_lea.vmem %s4, %s218
      %p220 = scmp.lt.s32.totalorder %s19, 1
      %s221 = scalar_select %p220, %s19, 1
      %s222 = smul.addr %s221, 8
      %s223 = scalar_lea.vmem %s0, %s222
      %s224 = smul.u32 32, %s20
      %p225 = scmp.lt.s32.totalorder %s224, 31
      %s226 = scalar_select %p225, %s224, 31
      %s227 = smul.addr %s226, 4
      %s228 = scalar_lea.vmem %s3, %s227
      %s229 = smul.u32 32, %s20
      %s230 = smul.u32 2, %s20
      %p231 = scmp.lt.s32.totalorder %s19, 1
      %s232 = scalar_select %p231, %s19, 1
      %p233 = scmp.lt.s32.totalorder %s230, 1
      %s234 = scalar_select %p233, %s230, 1
      %s235 = smul.addr %s232, 2
      %s236 = sadd.s32 %s234, %s235
      %s237 = smul.addr %s236, 8
      %s238 = scalar_lea.vmem %s4, %s237
      %s239 = smul.u32 2, %s20
      %p241 = scmp.eq.s32.totalorder %s20, 0
      // Predicated region
      $region37: #{gpt_forward.9} parent=35 // pred_check
        %p242 = pneg %p241
      $region38: #{gpt_forward.9} parent=35 // pred_check_branch
        %244 = sbr.rel (%p242) target = $region40
      $region39: #{gpt_forward.9} parent=35 // pred_region
        %v245 = vld [vmem:[%s223] sm:$0xff]
        %v246 = vld [vmem:[%s1] sm:$0x1]
        %v247 = vld [vmem:[%s2] sm:$0x1]
        %vm248 = vcmask 261120
        %v249 = vsel %vm248, %v245, 0.0
        %250 = vadd.xlane.f32.xlu0 %v249
        %v251 = vpop.xlane.xlu0 %250
        %v252 = vrcp.pop 32.0
        %v253 = vmul.f32 %v251, %v252
        %v254 = vsub.f32 %v245, %v253
        %v255 = vmul.f32 %v254, %v254
        %v256 = vsel %vm248, %v255, 0.0
        %257 = vadd.xlane.f32.xlu0 %v256
        %v258 = vpop.xlane.xlu0 %257
        %v259 = vmul.f32 %v258, %v252
        %v260 = vadd.f32 %v259, 1e-05
        %v261 = vrsqrt.pop %v260
        %v262 = vmul.f32 %v254, %v261
        %v264 = vlaneseq
        %v265 = vshrl.u32 %v264, 7
        %v266 = vsub.s32 0, %v265
        %v267 = vrot.slane %v246, %v266
        %v269 = vmul.f32 %v262, %v267
        %v271 = vlaneseq
        %v272 = vshrl.u32 %v271, 7
        %v273 = vsub.s32 0, %v272
        %v274 = vrot.slane %v247, %v273
        %v276 = vadd.f32 %v269, %v274
        %v277 = vpack.c.bf16 %v276, %v276
        %vm278 = vcmask 257024
        %279 = vst.msk [vmem:[#allocation2] sm:$0xf] %vm278, %v277
      $region40: #{gpt_forward.9} parent=35 // pred_fallthru
        _
      %v280 = vld [vmem:[#allocation2] sm:$0xf]
      %v281 = vld [vmem:[%s228] sm:$0xf]
      %v282 = vld [vmem:[%s228 + $0x4] sm:$0xf]
      %v283 = vld [vmem:[%s228 + $0x8] sm:$0xf]
      %v284 = vld [vmem:[%s228 + $0xc] sm:$0xf]
      %v285 = vld [vmem:[%s228 + $0x10] sm:$0xf]
      %v286 = vld [vmem:[%s228 + $0x14] sm:$0xf]
      %v287 = vld [vmem:[%s228 + $0x18] sm:$0xf]
      %v288 = vld [vmem:[%s228 + $0x1c] sm:$0xf]
      %v289 = vld [vmem:[%s228 + $0x20] sm:$0xf]
      %v290 = vld [vmem:[%s228 + $0x24] sm:$0xf]
      %v291 = vld [vmem:[%s228 + $0x28] sm:$0xf]
      %v292 = vld [vmem:[%s228 + $0x2c] sm:$0xf]
      %v293 = vld [vmem:[%s228 + $0x30] sm:$0xf]
      %v294 = vld [vmem:[%s228 + $0x34] sm:$0xf]
      %v295 = vld [vmem:[%s228 + $0x38] sm:$0xf]
      %v296 = vld [vmem:[%s228 + $0x3c] sm:$0xf]
      %v297 = vld [vmem:[%s228 + $0x40] sm:$0xf]
      %v298 = vld [vmem:[%s228 + $0x44] sm:$0xf]
      %v299 = vld [vmem:[%s228 + $0x48] sm:$0xf]
      %v300 = vld [vmem:[%s228 + $0x4c] sm:$0xf]
      %v301 = vld [vmem:[%s228 + $0x50] sm:$0xf]
      %v302 = vld [vmem:[%s228 + $0x54] sm:$0xf]
      %v303 = vld [vmem:[%s228 + $0x58] sm:$0xf]
      %v304 = vld [vmem:[%s228 + $0x5c] sm:$0xf]
      %v305 = vld [vmem:[%s228 + $0x60] sm:$0xf]
      %v306 = vld [vmem:[%s228 + $0x64] sm:$0xf]
      %v307 = vld [vmem:[%s228 + $0x68] sm:$0xf]
      %v308 = vld [vmem:[%s228 + $0x6c] sm:$0xf]
      %v309 = vld [vmem:[%s228 + $0x70] sm:$0xf]
      %v310 = vld [vmem:[%s228 + $0x74] sm:$0xf]
      %v311 = vld [vmem:[%s228 + $0x78] sm:$0xf]
      %v312 = vld [vmem:[%s228 + $0x7c] sm:$0xf]
      %v345 = vunpack.c.l.b16 %v281
      %v346 = vunpack.c.l.b16 %v282
      %v347 = vunpack.c.l.b16 %v283
      %v348 = vunpack.c.l.b16 %v284
      %v349 = vunpack.c.l.b16 %v285
      %v350 = vunpack.c.l.b16 %v286
      %v351 = vunpack.c.l.b16 %v287
      %v352 = vunpack.c.l.b16 %v288
      %v353 = vunpack.c.l.b16 %v289
      %v354 = vunpack.c.l.b16 %v290
      %v355 = vunpack.c.l.b16 %v291
      %v356 = vunpack.c.l.b16 %v292
      %v357 = vunpack.c.l.b16 %v293
      %v358 = vunpack.c.l.b16 %v294
      %v359 = vunpack.c.l.b16 %v295
      %v360 = vunpack.c.l.b16 %v296
      %v361 = vunpack.c.l.b16 %v297
      %v362 = vunpack.c.l.b16 %v298
      %v363 = vunpack.c.l.b16 %v299
      %v364 = vunpack.c.l.b16 %v300
      %v365 = vunpack.c.l.b16 %v301
      %v366 = vunpack.c.l.b16 %v302
      %v367 = vunpack.c.l.b16 %v303
      %v368 = vunpack.c.l.b16 %v304
      %v369 = vunpack.c.l.b16 %v305
      %v370 = vunpack.c.l.b16 %v306
      %v371 = vunpack.c.l.b16 %v307
      %v372 = vunpack.c.l.b16 %v308
      %v373 = vunpack.c.l.b16 %v309
      %v374 = vunpack.c.l.b16 %v310
      %v375 = vunpack.c.l.b16 %v311
      %v376 = vunpack.c.l.b16 %v312
      %v377 = vpack.c.b16 %v346, %v345
      %v378 = vpack.c.b16 %v348, %v347
      %v379 = vpack.c.b16 %v350, %v349
      %v380 = vpack.c.b16 %v352, %v351
      %v381 = vpack.c.b16 %v354, %v353
      %v382 = vpack.c.b16 %v356, %v355
      %v383 = vpack.c.b16 %v358, %v357
      %v384 = vpack.c.b16 %v360, %v359
      %v385 = vpack.c.b16 %v362, %v361
      %v386 = vpack.c.b16 %v364, %v363
      %v387 = vpack.c.b16 %v366, %v365
      %v388 = vpack.c.b16 %v368, %v367
      %v389 = vpack.c.b16 %v370, %v369
      %v390 = vpack.c.b16 %v372, %v371
      %v391 = vpack.c.b16 %v374, %v373
      %v392 = vpack.c.b16 %v376, %v375
      %vm393 = vcmask 261120
      %v395 = vsel %vm393, %v280, 0
      %v398 = vsel %vm393, %v377, 0
      %v401 = vsel %vm393, %v378, 0
      %v404 = vsel %vm393, %v379, 0
      %v407 = vsel %vm393, %v380, 0
      %v410 = vsel %vm393, %v381, 0
      %v413 = vsel %vm393, %v382, 0
      %v416 = vsel %vm393, %v383, 0
      %v419 = vsel %vm393, %v384, 0
      %v422 = vsel %vm393, %v385, 0
      %v425 = vsel %vm393, %v386, 0
      %v428 = vsel %vm393, %v387, 0
      %v431 = vsel %vm393, %v388, 0
      %v434 = vsel %vm393, %v389, 0
      %v437 = vsel %vm393, %v390, 0
      %v440 = vsel %vm393, %v391, 0
      %v443 = vsel %vm393, %v392, 0
      %445 = vmatprep.subr.bf16.mxu0 0
      %446 = vmatpush1.bf16.xpose.msra.mxu0 %v419
      %447 = vmatprep.subr.bf16.mxu0 0
      %448 = vmatpush1.bf16.xpose.msra.mxu0 %v416
      %449 = vmatprep.subr.bf16.mxu0 0
      %450 = vmatpush1.bf16.xpose.msra.mxu0 %v413
      %451 = vmatprep.subr.bf16.mxu0 0
      %452 = vmatpush1.bf16.xpose.msra.mxu0 %v410
      %453 = vmatprep.subr.bf16.mxu0 0
      %454 = vmatpush1.bf16.xpose.msra.mxu0 %v407
      %455 = vmatprep.subr.bf16.mxu0 0
      %456 = vmatpush1.bf16.xpose.msra.mxu0 %v404
      %457 = vmatprep.subr.bf16.mxu0 0
      %458 = vmatpush1.bf16.xpose.msra.mxu0 %v401
      %459 = vmatprep.subr.bf16.mxu0 0
      %460 = vmatpush1.bf16.xpose.msra.mxu0 %v398
      %461 = vmatprep.subr.bf16.mxu0 0
      %462 = vmatpush2.bf16.xpose.msra.mxu0 %v443
      %463 = vmatprep.subr.bf16.mxu0 0
      %464 = vmatpush2.bf16.xpose.msra.mxu0 %v440
      %465 = vmatprep.subr.bf16.mxu0 0
      %466 = vmatpush2.bf16.xpose.msra.mxu0 %v437
      %467 = vmatprep.subr.bf16.mxu0 0
      %468 = vmatpush2.bf16.xpose.msra.mxu0 %v434
      %469 = vmatprep.subr.bf16.mxu0 0
      %470 = vmatpush2.bf16.xpose.msra.mxu0 %v431
      %471 = vmatprep.subr.bf16.mxu0 0
      %472 = vmatpush2.bf16.xpose.msra.mxu0 %v428
      %473 = vmatprep.subr.bf16.mxu0 0
      %474 = vmatpush2.bf16.xpose.msra.mxu0 %v425
      %475 = vmatprep.subr.bf16.mxu0 0
      %476 = vmatpush2.bf16.xpose.msra.mxu0 %v422
      %477 = vmatprep.mubr.bf16.mxu0 0
      %478 = vmatmul.mubr.bf16.gmra.mxu0 %v395
      %v479 = vpop.f32.mrf.mxu0
      %v480 = vadd.f32 0.0, %v479
      %v481 = vpop.f32.mrf.mxu0
      %v482 = vadd.f32 0.0, %v481
      %v483 = vpop.f32.mrf.mxu0
      %v484 = vpop.f32.mrf.mxu0
      %485 = vdwg.mxu0
      %486 = vst [vmem:[%s238] sm:$0xff] %v480
      %487 = vst [vmem:[%s238 + $0x8] sm:$0xff] %v482
      %s488 = smul.u32 2, %s20
      %p489 = scmp.lt.s32.totalorder %s19, 1
      %s490 = scalar_select %p489, %s19, 1
      %p491 = scmp.lt.s32.totalorder %s488, 1
      %s492 = scalar_select %p491, %s488, 1
      %s493 = smul.addr %s490, 2
      %s494 = sadd.s32 %s492, %s493
      %s495 = smul.addr %s494, 8
      %s496 = scalar_lea.vmem %s4, %s495
      // Predicated region
      $region41: #{gpt_forward.9} parent=35 // pred_check
        %p497 = pneg %p141
      $region42: #{gpt_forward.9} parent=35 // pred_check_branch
        %499 = sbr.rel (%p497) target = $region44
      $region43: #{gpt_forward.9} parent=35 // pred_region
        %s500 = smul.u32 2, %s20
      $region44: #{gpt_forward.9} parent=35 // pred_fallthru
        _
    $region36: #{gpt_forward.9} parent=5 // pred_fallthru
      _
    %p501 = scmp.le.s32.totalorder 2, %s10
    // Predicated region
    $region45: #{gpt_forward.9} parent=5 // pred_check
      %p502 = pneg %p501
    $region46: #{gpt_forward.9} parent=5 // pred_check_branch
      %504 = sbr.rel (%p502) target = $region48
    $region47: #{gpt_forward.9} parent=5 // pred_region
      %s505 = ssub.s32 %s10, 2
      // Predicated region
      $region49: #{gpt_forward.9} parent=47 // pred_check
        %p506 = pneg %p147
      $region50: #{gpt_forward.9} parent=47 // pred_check_branch
        %508 = sbr.rel (%p506) target = $region52
      $region51: #{gpt_forward.9} parent=47 // pred_region
        %s509 = smul.u32 2, %s22
        %p510 = scmp.lt.s32.totalorder %s21, 1
        %s511 = scalar_select %p510, %s21, 1
        %p512 = scmp.lt.s32.totalorder %s509, 1
        %s513 = scalar_select %p512, %s509, 1
        %s514 = smul.addr %s511, 2
        %s515 = sadd.s32 %s513, %s514
        %s516 = smul.addr %s515, 8
        %s517 = scalar_lea.vmem %s4, %s516
      $region52: #{gpt_forward.9} parent=47 // pred_fallthru
        _
    $region48: #{gpt_forward.9} parent=5 // pred_fallthru
      _
  $region6: #{gpt_forward.9} parent=0 // loop_footer
    %s14 = sadd.s32 1, %s10
  $region7: #{gpt_forward.9} parent=0 // loop_footer_branch
    %9 = sbr.rel target = $region3
  $region8: #{gpt_forward.9} parent=0 // loop_exit
    _

// kernel: gpt_forward.6
$region0: #{gpt_forward.6}
  #allocation0 [shape = 'u32[]', space=smem, size = 0x4, offset = 0x4, fixed_abs, tag = 'smem constant byte address 0x4 - core index']
  #allocation1 [shape = 'u32[144,128]{1,0:T(1,128)}', space=vmem, size = 0x12000, scoped, tag = 'internal scratch']
  %s0 = inlined_call_operand.vmem [shape: f32[2,8,32], index: 0, kind: input, shape index: {}]
  %s1 = inlined_call_operand.vmem [shape: bf16[2,8,32], index: 1, kind: input, shape index: {}]
  %s2 = inlined_call_operand.vmem [shape: bf16[2,8,32], index: 2, kind: input, shape index: {}]
  %s3 = inlined_call_operand.vmem [shape: bf16[2,8,32], index: 3, kind: input, shape index: {}]
  %s4 = inlined_call_operand.vmem [shape: bf16[32,32], index: 4, kind: input, shape index: {}]
  %s5 = inlined_call_operand.vmem [shape: f32[1,32], index: 5, kind: input, shape index: {}]
  %s6 = inlined_call_operand.vmem [shape: f32[1,32], index: 6, kind: input, shape index: {}]
  %s7 = inlined_call_operand.vmem [shape: f32[1,32], index: 7, kind: input, shape index: {}]
  %s8 = inlined_call_operand.vmem [shape: bf16[32,128], index: 8, kind: input, shape index: {}]
  %s9 = inlined_call_operand.vmem [shape: f32[1,128], index: 9, kind: input, shape index: {}]
  %s10 = inlined_call_operand.vmem [shape: bf16[128,32], index: 10, kind: input, shape index: {}]
  %s11 = inlined_call_operand.vmem [shape: f32[1,32], index: 11, kind: input, shape index: {}]
  %s12 = inlined_call_operand.vmem [shape: f32[2,8,32], index: 12, kind: output, shape index: {}]
  %s13 = sld [smem:[#allocation0]]
  $region81: #{gpt_forward.6} parent=0
    _
  %s15 = ssub.s32 1, %s13
  %s16 = scalar_select 0, %s15, %s13
  loop: start=0, step=1, limit=4
  $region2: #{gpt_forward.6} parent=0 // loop_pre_header
    _
  $region3: #{gpt_forward.6} parent=0 // loop_header
    %s18 = sphi 0, %s22
    %p19 = scmp.ge.s32.totalorder %s18, 4
    %s25 = sphi 0, %s37
    %s26 = sphi 0, %s33
    %s27 = sphi 0, %s25
    %s28 = sphi 0, %s26
    %s29 = sphi 0, %s27
    %s30 = sphi 0, %s28
    %s42 = sphi 0, %s44
    %s45 = sphi 0, %s42
    %s46 = sphi 0, %s45
    %s62 = sphi 0, %s46
    %s70 = sphi 0, %s72
    %s73 = sphi 0, %s70
    %s74 = sphi 0, %s73
    %s90 = sphi 0, %s74
    %s96 = sphi 0, %s98
    %s99 = sphi 0, %s96
    %s100 = sphi 0, %s99
    %s116 = sphi 0, %s100
    %s122 = sphi 0, %s124
    %s125 = sphi 0, %s122
    %s126 = sphi 0, %s125
    %s142 = sphi 0, %s126
    %s146 = sphi 0, %s146
    %s148 = sphi 0, %s146
    %s149 = sphi 0, %s148
    %s163 = sphi 0, %s149
    %s167 = sphi 0, %s167
    %s169 = sphi 0, %s167
    %s170 = sphi 0, %s169
    %s184 = sphi 0, %s170
    %s188 = sphi 0, %s188
    %s190 = sphi 0, %s188
    %s191 = sphi 0, %s190
    %s205 = sphi 0, %s191
    %s209 = sphi 0, %s209
    %s211 = sphi 0, %s209
    %s212 = sphi 0, %s211
    %s226 = sphi 0, %s212
    %s230 = sphi 0, %s230
    %s232 = sphi 0, %s230
    %s233 = sphi 0, %s232
    %s247 = sphi 0, %s233
    %s251 = sphi 0, %s251
    %s253 = sphi 0, %s251
    %s254 = sphi 0, %s253
    %s268 = sphi 0, %s254
    %s272 = sphi 0, %s272
    %s274 = sphi 0, %s272
    %s275 = sphi 0, %s274
    %s289 = sphi 0, %s275
    %s293 = sphi 0, %s293
    %s295 = sphi 0, %s293
    %s296 = sphi 0, %s295
    %s310 = sphi 0, %s296
    %s318 = sphi 0, %s320
    %s321 = sphi 0, %s318
    %s322 = sphi 0, %s321
    %s338 = sphi 0, %s322
  $region4: #{gpt_forward.6} parent=0 // loop_header_branch
    %21 = sbr.rel (%p19) target = $region8
  $region5: #{gpt_forward.6} parent=0 // loop_body
    %s23 = ssub.s32 %s18, 1
    %s24 = ssub.s32 %s18, 2
    %s31 = sadd.s32 1, %s26
    %p32 = scmp.ge.s32.totalorder %s31, 1
    %s33 = scalar_select %p32, 0, %s31
    %s34 = sadd.s32 1, %s25
    %s35 = scalar_select %p32, %s34, %s25
    %p36 = scmp.ge.s32.totalorder %s35, 2
    %s37 = scalar_select %p36, 0, %s35
    %s38 = ssub.s32 %s25, %s37
    %s39 = ssub.s32 %s26, %s33
    %s40 = sor.u32 %s38, %s39
    %p41 = scmp.eq.s32.totalorder %s40, 0
    %s43 = sadd.s32 %s42, 1
    %s44 = scalar_select %p41, %s42, %s43
    %p47 = pneg %p41
    %p48 = scmp.eq.s32.totalorder %s18, 1
    %p49 = por %p47, %p48
    %p50 = scmp.ne.s32.totalorder %s42, %s45
    %p51 = scmp.eq.s32.totalorder %s18, 0
    %p52 = por %p50, %p51
    %p53 = scmp.ne.s32.totalorder %s42, %s45
    %p54 = scmp.eq.s32.totalorder %s23, 1
    %p55 = por %p53, %p54
    %p56 = scmp.ne.s32.totalorder %s45, %s46
    %p57 = scmp.eq.s32.totalorder %s23, 0
    %p58 = por %p56, %p57
    %p59 = scmp.ne.s32.totalorder %s45, %s46
    %p60 = scmp.eq.s32.totalorder %s24, 1
    %p61 = por %p59, %p60
    %p63 = scmp.ne.s32.totalorder %s46, %s62
    %p64 = scmp.eq.s32.totalorder %s24, 0
    %p65 = por %p63, %p64
    %s66 = ssub.s32 %s25, %s37
    %s67 = ssub.s32 %s26, %s33
    %s68 = sor.u32 %s66, %s67
    %p69 = scmp.eq.s32.totalorder %s68, 0
    %s71 = sadd.s32 %s70, 1
    %s72 = scalar_select %p69, %s70, %s71
    %p75 = pneg %p69
    %p76 = scmp.eq.s32.totalorder %s18, 1
    %p77 = por %p75, %p76
    %p78 = scmp.ne.s32.totalorder %s70, %s73
    %p79 = scmp.eq.s32.totalorder %s18, 0
    %p80 = por %p78, %p79
    %p81 = scmp.ne.s32.totalorder %s70, %s73
    %p82 = scmp.eq.s32.totalorder %s23, 1
    %p83 = por %p81, %p82
    %p84 = scmp.ne.s32.totalorder %s73, %s74
    %p85 = scmp.eq.s32.totalorder %s23, 0
    %p86 = por %p84, %p85
    %p87 = scmp.ne.s32.totalorder %s73, %s74
    %p88 = scmp.eq.s32.totalorder %s24, 1
    %p89 = por %p87, %p88
    %p91 = scmp.ne.s32.totalorder %s74, %s90
    %p92 = scmp.eq.s32.totalorder %s24, 0
    %p93 = por %p91, %p92
    %s94 = ssub.s32 %s25, %s37
    %p95 = scmp.eq.s32.totalorder %s94, 0
    %s97 = sadd.s32 %s96, 1
    %s98 = scalar_select %p95, %s96, %s97
    %p101 = pneg %p95
    %p102 = scmp.eq.s32.totalorder %s18, 1
    %p103 = por %p101, %p102
    %p104 = scmp.ne.s32.totalorder %s96, %s99
    %p105 = scmp.eq.s32.totalorder %s18, 0
    %p106 = por %p104, %p105
    %p107 = scmp.ne.s32.totalorder %s96, %s99
    %p108 = scmp.eq.s32.totalorder %s23, 1
    %p109 = por %p107, %p108
    %p110 = scmp.ne.s32.totalorder %s99, %s100
    %p111 = scmp.eq.s32.totalorder %s23, 0
    %p112 = por %p110, %p111
    %p113 = scmp.ne.s32.totalorder %s99, %s100
    %p114 = scmp.eq.s32.totalorder %s24, 1
    %p115 = por %p113, %p114
    %p117 = scmp.ne.s32.totalorder %s100, %s116
    %p118 = scmp.eq.s32.totalorder %s24, 0
    %p119 = por %p117, %p118
    %s120 = ssub.s32 %s25, %s37
    %p121 = scmp.eq.s32.totalorder %s120, 0
    %s123 = sadd.s32 %s122, 1
    %s124 = scalar_select %p121, %s122, %s123
    %p127 = pneg %p121
    %p128 = scmp.eq.s32.totalorder %s18, 1
    %p129 = por %p127, %p128
    %p130 = scmp.ne.s32.totalorder %s122, %s125
    %p131 = scmp.eq.s32.totalorder %s18, 0
    %p132 = por %p130, %p131
    %p133 = scmp.ne.s32.totalorder %s122, %s125
    %p134 = scmp.eq.s32.totalorder %s23, 1
    %p135 = por %p133, %p134
    %p136 = scmp.ne.s32.totalorder %s125, %s126
    %p137 = scmp.eq.s32.totalorder %s23, 0
    %p138 = por %p136, %p137
    %p139 = scmp.ne.s32.totalorder %s125, %s126
    %p140 = scmp.eq.s32.totalorder %s24, 1
    %p141 = por %p139, %p140
    %p143 = scmp.ne.s32.totalorder %s126, %s142
    %p144 = scmp.eq.s32.totalorder %s24, 0
    %p145 = por %p143, %p144
    %s147 = sadd.s32 %s146, 1
    %p150 = scmp.eq.s32.totalorder %s18, 1
    %p151 = scmp.ne.s32.totalorder %s146, %s148
    %p152 = scmp.eq.s32.totalorder %s18, 0
    %p153 = por %p151, %p152
    %p154 = scmp.ne.s32.totalorder %s146, %s148
    %p155 = scmp.eq.s32.totalorder %s23, 1
    %p156 = por %p154, %p155
    %p157 = scmp.ne.s32.totalorder %s148, %s149
    %p158 = scmp.eq.s32.totalorder %s23, 0
    %p159 = por %p157, %p158
    %p160 = scmp.ne.s32.totalorder %s148, %s149
    %p161 = scmp.eq.s32.totalorder %s24, 1
    %p162 = por %p160, %p161
    %p164 = scmp.ne.s32.totalorder %s149, %s163
    %p165 = scmp.eq.s32.totalorder %s24, 0
    %p166 = por %p164, %p165
    %s168 = sadd.s32 %s167, 1
    %p171 = scmp.eq.s32.totalorder %s18, 1
    %p172 = scmp.ne.s32.totalorder %s167, %s169
    %p173 = scmp.eq.s32.totalorder %s18, 0
    %p174 = por %p172, %p173
    %p175 = scmp.ne.s32.totalorder %s167, %s169
    %p176 = scmp.eq.s32.totalorder %s23, 1
    %p177 = por %p175, %p176
    %p178 = scmp.ne.s32.totalorder %s169, %s170
    %p179 = scmp.eq.s32.totalorder %s23, 0
    %p180 = por %p178, %p179
    %p181 = scmp.ne.s32.totalorder %s169, %s170
    %p182 = scmp.eq.s32.totalorder %s24, 1
    %p183 = por %p181, %p182
    %p185 = scmp.ne.s32.totalorder %s170, %s184
    %p186 = scmp.eq.s32.totalorder %s24, 0
    %p187 = por %p185, %p186
    %s189 = sadd.s32 %s188, 1
    %p192 = scmp.eq.s32.totalorder %s18, 1
    %p193 = scmp.ne.s32.totalorder %s188, %s190
    %p194 = scmp.eq.s32.totalorder %s18, 0
    %p195 = por %p193, %p194
    %p196 = scmp.ne.s32.totalorder %s188, %s190
    %p197 = scmp.eq.s32.totalorder %s23, 1
    %p198 = por %p196, %p197
    %p199 = scmp.ne.s32.totalorder %s190, %s191
    %p200 = scmp.eq.s32.totalorder %s23, 0
    %p201 = por %p199, %p200
    %p202 = scmp.ne.s32.totalorder %s190, %s191
    %p203 = scmp.eq.s32.totalorder %s24, 1
    %p204 = por %p202, %p203
    %p206 = scmp.ne.s32.totalorder %s191, %s205
    %p207 = scmp.eq.s32.totalorder %s24, 0
    %p208 = por %p206, %p207
    %s210 = sadd.s32 %s209, 1
    %p213 = scmp.eq.s32.totalorder %s18, 1
    %p214 = scmp.ne.s32.totalorder %s209, %s211
    %p215 = scmp.eq.s32.totalorder %s18, 0
    %p216 = por %p214, %p215
    %p217 = scmp.ne.s32.totalorder %s209, %s211
    %p218 = scmp.eq.s32.totalorder %s23, 1
    %p219 = por %p217, %p218
    %p220 = scmp.ne.s32.totalorder %s211, %s212
    %p221 = scmp.eq.s32.totalorder %s23, 0
    %p222 = por %p220, %p221
    %p223 = scmp.ne.s32.totalorder %s211, %s212
    %p224 = scmp.eq.s32.totalorder %s24, 1
    %p225 = por %p223, %p224
    %p227 = scmp.ne.s32.totalorder %s212, %s226
    %p228 = scmp.eq.s32.totalorder %s24, 0
    %p229 = por %p227, %p228
    %s231 = sadd.s32 %s230, 1
    %p234 = scmp.eq.s32.totalorder %s18, 1
    %p235 = scmp.ne.s32.totalorder %s230, %s232
    %p236 = scmp.eq.s32.totalorder %s18, 0
    %p237 = por %p235, %p236
    %p238 = scmp.ne.s32.totalorder %s230, %s232
    %p239 = scmp.eq.s32.totalorder %s23, 1
    %p240 = por %p238, %p239
    %p241 = scmp.ne.s32.totalorder %s232, %s233
    %p242 = scmp.eq.s32.totalorder %s23, 0
    %p243 = por %p241, %p242
    %p244 = scmp.ne.s32.totalorder %s232, %s233
    %p245 = scmp.eq.s32.totalorder %s24, 1
    %p246 = por %p244, %p245
    %p248 = scmp.ne.s32.totalorder %s233, %s247
    %p249 = scmp.eq.s32.totalorder %s24, 0
    %p250 = por %p248, %p249
    %s252 = sadd.s32 %s251, 1
    %p255 = scmp.eq.s32.totalorder %s18, 1
    %p256 = scmp.ne.s32.totalorder %s251, %s253
    %p257 = scmp.eq.s32.totalorder %s18, 0
    %p258 = por %p256, %p257
    %p259 = scmp.ne.s32.totalorder %s251, %s253
    %p260 = scmp.eq.s32.totalorder %s23, 1
    %p261 = por %p259, %p260
    %p262 = scmp.ne.s32.totalorder %s253, %s254
    %p263 = scmp.eq.s32.totalorder %s23, 0
    %p264 = por %p262, %p263
    %p265 = scmp.ne.s32.totalorder %s253, %s254
    %p266 = scmp.eq.s32.totalorder %s24, 1
    %p267 = por %p265, %p266
    %p269 = scmp.ne.s32.totalorder %s254, %s268
    %p270 = scmp.eq.s32.totalorder %s24, 0
    %p271 = por %p269, %p270
    %s273 = sadd.s32 %s272, 1
    %p276 = scmp.eq.s32.totalorder %s18, 1
    %p277 = scmp.ne.s32.totalorder %s272, %s274
    %p278 = scmp.eq.s32.totalorder %s18, 0
    %p279 = por %p277, %p278
    %p280 = scmp.ne.s32.totalorder %s272, %s274
    %p281 = scmp.eq.s32.totalorder %s23, 1
    %p282 = por %p280, %p281
    %p283 = scmp.ne.s32.totalorder %s274, %s275
    %p284 = scmp.eq.s32.totalorder %s23, 0
    %p285 = por %p283, %p284
    %p286 = scmp.ne.s32.totalorder %s274, %s275
    %p287 = scmp.eq.s32.totalorder %s24, 1
    %p288 = por %p286, %p287
    %p290 = scmp.ne.s32.totalorder %s275, %s289
    %p291 = scmp.eq.s32.totalorder %s24, 0
    %p292 = por %p290, %p291
    %s294 = sadd.s32 %s293, 1
    %p297 = scmp.eq.s32.totalorder %s18, 1
    %p298 = scmp.ne.s32.totalorder %s293, %s295
    %p299 = scmp.eq.s32.totalorder %s18, 0
    %p300 = por %p298, %p299
    %p301 = scmp.ne.s32.totalorder %s293, %s295
    %p302 = scmp.eq.s32.totalorder %s23, 1
    %p303 = por %p301, %p302
    %p304 = scmp.ne.s32.totalorder %s295, %s296
    %p305 = scmp.eq.s32.totalorder %s23, 0
    %p306 = por %p304, %p305
    %p307 = scmp.ne.s32.totalorder %s295, %s296
    %p308 = scmp.eq.s32.totalorder %s24, 1
    %p309 = por %p307, %p308
    %p311 = scmp.ne.s32.totalorder %s296, %s310
    %p312 = scmp.eq.s32.totalorder %s24, 0
    %p313 = por %p311, %p312
    %s314 = ssub.s32 %s25, %s37
    %s315 = ssub.s32 %s26, %s33
    %s316 = sor.u32 %s314, %s315
    %p317 = scmp.eq.s32.totalorder %s316, 0
    %s319 = sadd.s32 %s318, 1
    %s320 = scalar_select %p317, %s318, %s319
    %p323 = pneg %p317
    %p324 = scmp.eq.s32.totalorder %s18, 1
    %p325 = por %p323, %p324
    %p326 = scmp.ne.s32.totalorder %s318, %s321
    %p327 = scmp.eq.s32.totalorder %s18, 0
    %p328 = por %p326, %p327
    %p329 = scmp.ne.s32.totalorder %s318, %s321
    %p330 = scmp.eq.s32.totalorder %s23, 1
    %p331 = por %p329, %p330
    %p332 = scmp.ne.s32.totalorder %s321, %s322
    %p333 = scmp.eq.s32.totalorder %s23, 0
    %p334 = por %p332, %p333
    %p335 = scmp.ne.s32.totalorder %s321, %s322
    %p336 = scmp.eq.s32.totalorder %s24, 1
    %p337 = por %p335, %p336
    %p339 = scmp.ne.s32.totalorder %s322, %s338
    %p340 = scmp.eq.s32.totalorder %s24, 0
    %p341 = por %p339, %p340
    %p342 = scmp.le.s32.totalorder 1, %s18
    %p343 = scmp.lt.s32.totalorder %s18, 3
    %p344 = pnand %p342, %p343
    %p345 = pneg %p344
    // Predicated region
    $region9: #{gpt_forward.6} parent=5 // pred_check
      _
    $region10: #{gpt_forward.6} parent=5 // pred_check_branch
      %347 = sbr.rel (%p344) target = $region12
    $region11: #{gpt_forward.6} parent=5 // pred_region
      %s348 = ssub.s32 %s18, 1
      // Predicated region
      $region13: #{gpt_forward.6} parent=11 // pred_check
        %p349 = pneg %p159
      $region14: #{gpt_forward.6} parent=11 // pred_check_branch
        %351 = sbr.rel (%p349) target = $region16
      $region15: #{gpt_forward.6} parent=11 // pred_region
        _
      $region16: #{gpt_forward.6} parent=11 // pred_fallthru
        _
      // Predicated region
      $region17: #{gpt_forward.6} parent=11 // pred_check
        %p352 = pneg %p180
      $region18: #{gpt_forward.6} parent=11 // pred_check_branch
        %354 = sbr.rel (%p352) target = $region20
      $region19: #{gpt_forward.6} parent=11 // pred_region
        _
      $region20: #{gpt_forward.6} parent=11 // pred_fallthru
        _
      // Predicated region
      $region21: #{gpt_forward.6} parent=11 // pred_check
        %p355 = pneg %p201
      $region22: #{gpt_forward.6} parent=11 // pred_check_branch
        %357 = sbr.rel (%p355) target = $region24
      $region23: #{gpt_forward.6} parent=11 // pred_region
        _
      $region24: #{gpt_forward.6} parent=11 // pred_fallthru
        _
      // Predicated region
      $region25: #{gpt_forward.6} parent=11 // pred_check
        %p358 = pneg %p222
      $region26: #{gpt_forward.6} parent=11 // pred_check_branch
        %360 = sbr.rel (%p358) target = $region28
      $region27: #{gpt_forward.6} parent=11 // pred_region
        _
      $region28: #{gpt_forward.6} parent=11 // pred_fallthru
        _
      // Predicated region
      $region29: #{gpt_forward.6} parent=11 // pred_check
        %p361 = pneg %p243
      $region30: #{gpt_forward.6} parent=11 // pred_check_branch
        %363 = sbr.rel (%p361) target = $region32
      $region31: #{gpt_forward.6} parent=11 // pred_region
        _
      $region32: #{gpt_forward.6} parent=11 // pred_fallthru
        _
      // Predicated region
      $region33: #{gpt_forward.6} parent=11 // pred_check
        %p364 = pneg %p264
      $region34: #{gpt_forward.6} parent=11 // pred_check_branch
        %366 = sbr.rel (%p364) target = $region36
      $region35: #{gpt_forward.6} parent=11 // pred_region
        _
      $region36: #{gpt_forward.6} parent=11 // pred_fallthru
        _
      // Predicated region
      $region37: #{gpt_forward.6} parent=11 // pred_check
        %p367 = pneg %p285
      $region38: #{gpt_forward.6} parent=11 // pred_check_branch
        %369 = sbr.rel (%p367) target = $region40
      $region39: #{gpt_forward.6} parent=11 // pred_region
        _
      $region40: #{gpt_forward.6} parent=11 // pred_fallthru
        _
      // Predicated region
      $region41: #{gpt_forward.6} parent=11 // pred_check
        %p370 = pneg %p306
      $region42: #{gpt_forward.6} parent=11 // pred_check_branch
        %372 = sbr.rel (%p370) target = $region44
      $region43: #{gpt_forward.6} parent=11 // pred_region
        _
      $region44: #{gpt_forward.6} parent=11 // pred_fallthru
        _
    $region12: #{gpt_forward.6} parent=5 // pred_fallthru
      _
    %p373 = scmp.lt.s32.totalorder %s18, 2
    // Predicated region
    $region45: #{gpt_forward.6} parent=5 // pred_check
      %p374 = pneg %p373
    $region46: #{gpt_forward.6} parent=5 // pred_check_branch
      %376 = sbr.rel (%p374) target = $region48
    $region47: #{gpt_forward.6} parent=5 // pred_region
      // Predicated region
      $region49: #{gpt_forward.6} parent=47 // pred_check
        %p377 = pneg %p52
      $region50: #{gpt_forward.6} parent=47 // pred_check_branch
        %379 = sbr.rel (%p377) target = $region52
      $region51: #{gpt_forward.6} parent=47 // pred_region
        %p380 = scmp.lt.s32.totalorder %s25, 1
        %s381 = scalar_select %p380, %s25, 1
        %p382 = scmp.lt.s32.totalorder %s26, 0
        %s383 = scalar_select %p382, %s26, 0
        %s384 = sadd.s32 %s383, %s381
        %s385 = smul.addr %s384, 8
        %s386 = scalar_lea.vmem %s0, %s385
      $region52: #{gpt_forward.6} parent=47 // pred_fallthru
        _
      // Predicated region
      $region53: #{gpt_forward.6} parent=47 // pred_check
        %p387 = pneg %p80
      $region54: #{gpt_forward.6} parent=47 // pred_check_branch
        %389 = sbr.rel (%p387) target = $region56
      $region55: #{gpt_forward.6} parent=47 // pred_region
        %p390 = scmp.lt.s32.totalorder %s25, 1
        %s391 = scalar_select %p390, %s25, 1
        %p392 = scmp.lt.s32.totalorder %s26, 0
        %s393 = scalar_select %p392, %s26, 0
        %s394 = sadd.s32 %s393, %s391
        %s395 = smul.addr %s394, 4
        %s396 = scalar_lea.vmem %s1, %s395
      $region56: #{gpt_forward.6} parent=47 // pred_fallthru
        _
      // Predicated region
      $region57: #{gpt_forward.6} parent=47 // pred_check
        %p397 = pneg %p106
      $region58: #{gpt_forward.6} parent=47 // pred_check_branch
        %399 = sbr.rel (%p397) target = $region60
      $region59: #{gpt_forward.6} parent=47 // pred_region
        %p400 = scmp.lt.s32.totalorder %s25, 1
        %s401 = scalar_select %p400, %s25, 1
        %s402 = smul.addr %s401, 4
        %s403 = scalar_lea.vmem %s2, %s402
      $region60: #{gpt_forward.6} parent=47 // pred_fallthru
        _
      // Predicated region
      $region61: #{gpt_forward.6} parent=47 // pred_check
        %p404 = pneg %p132
      $region62: #{gpt_forward.6} parent=47 // pred_check_branch
        %406 = sbr.rel (%p404) target = $region64
      $region63: #{gpt_forward.6} parent=47 // pred_region
        %p407 = scmp.lt.s32.totalorder %s25, 1
        %s408 = scalar_select %p407, %s25, 1
        %s409 = smul.addr %s408, 4
        %s410 = scalar_lea.vmem %s3, %s409
      $region64: #{gpt_forward.6} parent=47 // pred_fallthru
        _
    $region48: #{gpt_forward.6} parent=5 // pred_fallthru
      _
    %p411 = scmp.le.s32.totalorder 1, %s18
    %p412 = scmp.lt.s32.totalorder %s18, 3
    %p413 = pnand %p411, %p412
    %p414 = pneg %p413
    // Predicated region
    $region65: #{gpt_forward.6} parent=5 // pred_check
      _
    $region66: #{gpt_forward.6} parent=5 // pred_check_branch
      %416 = sbr.rel (%p413) target = $region68
    $region67: #{gpt_forward.6} parent=5 // pred_region
      %s417 = ssub.s32 %s18, 1
      %p418 = scmp.lt.s32.totalorder %s27, 1
      %s419 = scalar_select %p418, %s27, 1
      %p420 = scmp.lt.s32.totalorder %s28, 0
      %s421 = scalar_select %p420, %s28, 0
      %s422 = sadd.s32 %s421, %s419
      %s423 = smul.addr %s422, 8
      %s424 = scalar_lea.vmem %s0, %s423
      %p425 = pneg %p58
      %p426 = pneg %p55
      %p427 = scmp.lt.s32.totalorder %s27, 1
      %s428 = scalar_select %p427, %s27, 1
      %p429 = scmp.lt.s32.totalorder %s28, 0
      %s430 = scalar_select %p429, %s28, 0
      %s431 = sadd.s32 %s430, %s428
      %s432 = smul.addr %s431, 4
      %s433 = scalar_lea.vmem %s1, %s432
      %p434 = pneg %p86
      %p435 = pneg %p83
      %p436 = scmp.lt.s32.totalorder %s27, 1
      %s437 = scalar_select %p436, %s27, 1
      %s438 = smul.addr %s437, 4
      %s439 = scalar_lea.vmem %s2, %s438
      %p440 = pneg %p112
      %p441 = pneg %p109
      %p442 = scmp.lt.s32.totalorder %s27, 1
      %s443 = scalar_select %p442, %s27, 1
      %s444 = smul.addr %s443, 4
      %s445 = scalar_lea.vmem %s3, %s444
      %p446 = pneg %p138
      %p447 = pneg %p135
      %p448 = pneg %p159
      %p449 = pneg %p156
      %p450 = pneg %p180
      %p451 = pneg %p177
      %p452 = pneg %p201
      %p453 = pneg %p198
      %p454 = pneg %p222
      %p455 = pneg %p219
      %p456 = pneg %p243
      %p457 = pneg %p240
      %p458 = pneg %p264
      %p459 = pneg %p261
      %p460 = pneg %p285
      %p461 = pneg %p282
      %p462 = pneg %p306
      %p463 = pneg %p303
      %p464 = pneg %p334
      %p465 = pneg %p331
      %p466 = scmp.lt.s32.totalorder %s27, 1
      %s467 = scalar_select %p466, %s27, 1
      %p468 = scmp.lt.s32.totalorder %s28, 0
      %s469 = scalar_select %p468, %s28, 0
      %s470 = sadd.s32 %s469, %s467
      %s471 = smul.addr %s470, 8
      %s472 = scalar_lea.vmem %s12, %s471
      %p473 = scmp.lt.s32.totalorder %s27, 1
      %s474 = scalar_select %p473, %s27, 1
      %p475 = scmp.lt.s32.totalorder %s28, 0
      %s476 = scalar_select %p475, %s28, 0
      %s477 = sadd.s32 %s476, %s474
      %s478 = smul.addr %s477, 8
      %s479 = scalar_lea.vmem %s0, %s478
      %p480 = scmp.lt.s32.totalorder %s27, 1
      %s481 = scalar_select %p480, %s27, 1
      %p482 = scmp.lt.s32.totalorder %s28, 0
      %s483 = scalar_select %p482, %s28, 0
      %s484 = sadd.s32 %s483, %s481
      %s485 = smul.addr %s484, 4
      %s486 = scalar_lea.vmem %s1, %s485
      %p487 = scmp.lt.s32.totalorder %s27, 1
      %s488 = scalar_select %p487, %s27, 1
      %s489 = smul.addr %s488, 4
      %s490 = scalar_lea.vmem %s2, %s489
      %p491 = scmp.lt.s32.totalorder %s27, 1
      %s492 = scalar_select %p491, %s27, 1
      %s493 = smul.addr %s492, 4
      %s494 = scalar_lea.vmem %s3, %s493
      %p495 = scmp.lt.s32.totalorder %s27, 1
      %s496 = scalar_select %p495, %s27, 1
      %p497 = scmp.lt.s32.totalorder %s28, 0
      %s498 = scalar_select %p497, %s28, 0
      %s499 = sadd.s32 %s498, %s496
      %s500 = smul.addr %s499, 8
      %s501 = scalar_lea.vmem %s12, %s500
      %v503 = vld [vmem:[%s479] sm:$0xff]
      %v504 = vld [vmem:[%s486] sm:$0xf]
      %v505 = vld [vmem:[%s490] sm:$0xf]
      %v506 = vld [vmem:[%s494] sm:$0xf]
      %s507 = smul.u32 %s28, 8
      %v508 = vlaneseq
      %v509 = vshrl.u32 %v508, 7
      %v510 = vstv %s507
      %v511 = vadd.s32 %v510, %v509
      %v512 = vlaneseq
      %v513 = vand.u32 %v512, 127
      %vm514 = vcmp.ge.s32.totalorder %v511, %v513
      %vm515 = vcmask 130048
      %v517 = vsel %vm515, %v504, 0
      %v520 = vsel %vm515, %v505, 0
      %522 = vmatprep.subr.bf16.mxu0 0
      %523 = vmatpush1.bf16.xpose.msra.mxu0 0
      %524 = vmatprep.subr.bf16.mxu0 0
      %525 = vmatpush1.bf16.xpose.msra.mxu0 0
      %526 = vmatprep.subr.bf16.mxu0 0
      %527 = vmatpush1.bf16.xpose.msra.mxu0 0
      %528 = vmatprep.subr.bf16.mxu0 0
      %529 = vmatpush1.bf16.xpose.msra.mxu0 0
      %530 = vmatprep.subr.bf16.mxu0 0
      %531 = vmatpush1.bf16.xpose.msra.mxu0 0
      %532 = vmatprep.subr.bf16.mxu0 0
      %533 = vmatpush1.bf16.xpose.msra.mxu0 0
      %534 = vmatprep.subr.bf16.mxu0 0
      %535 = vmatpush1.bf16.xpose.msra.mxu0 0
      %536 = vmatprep.subr.bf16.mxu0 0
      %537 = vmatpush1.bf16.xpose.msra.mxu0 %v520
      %538 = vmatprep.subr.bf16.mxu0 0
      %539 = vmatpush2.bf16.xpose.msra.mxu0 0
      %540 = vmatprep.subr.bf16.mxu0 0
      %541 = vmatpush2.bf16.xpose.msra.mxu0 0
      %542 = vmatprep.subr.bf16.mxu0 0
      %543 = vmatpush2.bf16.xpose.msra.mxu0 0
      %544 = vmatprep.subr.bf16.mxu0 0
      %545 = vmatpush2.bf16.xpose.msra.mxu0 0
      %546 = vmatprep.subr.bf16.mxu0 0
      %547 = vmatpush2.bf16.xpose.msra.mxu0 0
      %548 = vmatprep.subr.bf16.mxu0 0
      %549 = vmatpush2.bf16.xpose.msra.mxu0 0
      %550 = vmatprep.subr.bf16.mxu0 0
      %551 = vmatpush2.bf16.xpose.msra.mxu0 0
      %552 = vmatprep.subr.bf16.mxu0 0
      %553 = vmatpush2.bf16.xpose.msra.mxu0 0
      %554 = vmatprep.mubr.bf16.mxu0 0
      %555 = vmatmul.mubr.bf16.gmra.mxu0 %v517
      %v556 = vpop.f32.mrf.mxu0
      %v557 = vadd.f32 0.0, %v556
      %v558 = vpop.f32.mrf.mxu0
      %v559 = vpop.f32.mrf.mxu0
      %v560 = vpop.f32.mrf.mxu0
      %561 = vdwg.mxu0
      %v562 = vsel %vm514, %v557, -1e+30
      %vm563 = vcmask 64512
      %v564 = vsel %vm563, %v562, -inf
      %565 = vmax.xlane.f32.xlu0 %v564
      %v566 = vpop.xlane.xlu0 %565
      %v567 = vsub.f32 %v562, %v566
      %v568 = vmul.f32 %v567, 1.442695
      %v569 = vpow.pop %v568
      %v570 = vsel %vm563, %v569, 0.0
      %571 = vadd.xlane.f32.xlu0 %v570
      %v572 = vpop.xlane.xlu0 %571
      %v573 = vrcp.pop %v572
      %v574 = vmul.f32 %v569, %v573
      %v575 = vpack.c.bf16 %v574, %v574
      %v577 = vsel %vm563, %v575, 0
      %vm579 = vcmask 1043456
      %v581 = vsel %vm579, %v506, 0
      %583 = vmatprep.subr.bf16.mxu0 0
      %584 = vmatpush1.bf16.msra.mxu0 0
      %585 = vmatprep.subr.bf16.mxu0 0
      %586 = vmatpush1.bf16.msra.mxu0 0
      %587 = vmatprep.subr.bf16.mxu0 0
      %588 = vmatpush1.bf16.msra.mxu0 0
      %589 = vmatprep.subr.bf16.mxu0 0
      %590 = vmatpush1.bf16.msra.mxu0 0
      %591 = vmatprep.subr.bf16.mxu0 0
      %592 = vmatpush1.bf16.msra.mxu0 0
      %593 = vmatprep.subr.bf16.mxu0 0
      %594 = vmatpush1.bf16.msra.mxu0 0
      %595 = vmatprep.subr.bf16.mxu0 0
      %596 = vmatpush1.bf16.msra.mxu0 0
      %597 = vmatprep.subr.bf16.mxu0 0
      %598 = vmatpush1.bf16.msra.mxu0 %v581
      %599 = vmatprep.subr.bf16.mxu0 0
      %600 = vmatpush2.bf16.msra.mxu0 0
      %601 = vmatprep.subr.bf16.mxu0 0
      %602 = vmatpush2.bf16.msra.mxu0 0
      %603 = vmatprep.subr.bf16.mxu0 0
      %604 = vmatpush2.bf16.msra.mxu0 0
      %605 = vmatprep.subr.bf16.mxu0 0
      %606 = vmatpush2.bf16.msra.mxu0 0
      %607 = vmatprep.subr.bf16.mxu0 0
      %608 = vmatpush2.bf16.msra.mxu0 0
      %609 = vmatprep.subr.bf16.mxu0 0
      %610 = vmatpush2.bf16.msra.mxu0 0
      %611 = vmatprep.subr.bf16.mxu0 0
      %612 = vmatpush2.bf16.msra.mxu0 0
      %613 = vmatprep.subr.bf16.mxu0 0
      %614 = vmatpush2.bf16.msra.mxu0 0
      %615 = vmatprep.mubr.bf16.mxu0 0
      %616 = vmatmul.mubr.bf16.gmra.mxu0 %v577
      %v617 = vpop.f32.mrf.mxu0
      %v618 = vadd.f32 0.0, %v617
      %v619 = vpop.f32.mrf.mxu0
      %v620 = vpop.f32.mrf.mxu0
      %v621 = vpop.f32.mrf.mxu0
      %622 = vdwg.mxu0
      %v623 = vpack.c.bf16 %v618, %v618
      %v625 = vunpack.c.l.b16 %v504
      %v626 = vpack.c.b16 %v625, %v625
      %627 = vrot.lane.b32.xlu0 %v626, 112
      %v628 = vpop.permute.xlu0 %627
      %v630 = vunpack.c.l.b16 %v505
      %v631 = vpack.c.b16 %v630, %v630
      %632 = vrot.lane.b32.xlu0 %v631, 112
      %v633 = vpop.permute.xlu0 %632
      %v635 = vsel %vm515, %v628, 0
      %v638 = vsel %vm515, %v633, 0
      %640 = vmatprep.subr.bf16.mxu0 0
      %641 = vmatpush1.bf16.xpose.msra.mxu0 0
      %642 = vmatprep.subr.bf16.mxu0 0
      %643 = vmatpush1.bf16.xpose.msra.mxu0 0
      %644 = vmatprep.subr.bf16.mxu0 0
      %645 = vmatpush1.bf16.xpose.msra.mxu0 0
      %646 = vmatprep.subr.bf16.mxu0 0
      %647 = vmatpush1.bf16.xpose.msra.mxu0 0
      %648 = vmatprep.subr.bf16.mxu0 0
      %649 = vmatpush1.bf16.xpose.msra.mxu0 0
      %650 = vmatprep.subr.bf16.mxu0 0
      %651 = vmatpush1.bf16.xpose.msra.mxu0 0
      %652 = vmatprep.subr.bf16.mxu0 0
      %653 = vmatpush1.bf16.xpose.msra.mxu0 0
      %654 = vmatprep.subr.bf16.mxu0 0
      %655 = vmatpush1.bf16.xpose.msra.mxu0 %v638
      %656 = vmatprep.subr.bf16.mxu0 0
      %657 = vmatpush2.bf16.xpose.msra.mxu0 0
      %658 = vmatprep.subr.bf16.mxu0 0
      %659 = vmatpush2.bf16.xpose.msra.mxu0 0
      %660 = vmatprep.subr.bf16.mxu0 0
      %661 = vmatpush2.bf16.xpose.msra.mxu0 0
      %662 = vmatprep.subr.bf16.mxu0 0
      %663 = vmatpush2.bf16.xpose.msra.mxu0 0
      %664 = vmatprep.subr.bf16.mxu0 0
      %665 = vmatpush2.bf16.xpose.msra.mxu0 0
      %666 = vmatprep.subr.bf16.mxu0 0
      %667 = vmatpush2.bf16.xpose.msra.mxu0 0
      %668 = vmatprep.subr.bf16.mxu0 0
      %669 = vmatpush2.bf16.xpose.msra.mxu0 0
      %670 = vmatprep.subr.bf16.mxu0 0
      %671 = vmatpush2.bf16.xpose.msra.mxu0 0
      %672 = vmatprep.mubr.bf16.mxu0 0
      %673 = vmatmul.mubr.bf16.gmra.mxu0 %v635
      %v674 = vpop.f32.mrf.mxu0
      %v675 = vadd.f32 0.0, %v674
      %v676 = vpop.f32.mrf.mxu0
      %v677 = vpop.f32.mrf.mxu0
      %v678 = vpop.f32.mrf.mxu0
      %679 = vdwg.mxu0
      %v680 = vsel %vm514, %v675, -1e+30
      %v681 = vsel %vm563, %v680, -inf
      %682 = vmax.xlane.f32.xlu0 %v681
      %v683 = vpop.xlane.xlu0 %682
      %v684 = vsub.f32 %v680, %v683
      %v685 = vmul.f32 %v684, 1.442695
      %v686 = vpow.pop %v685
      %v687 = vsel %vm563, %v686, 0.0
      %688 = vadd.xlane.f32.xlu0 %v687
      %v689 = vpop.xlane.xlu0 %688
      %v690 = vrcp.pop %v689
      %v691 = vmul.f32 %v686, %v690
      %v692 = vpack.c.bf16 %v691, %v691
      %v694 = vunpack.c.l.b16 %v506
      %v695 = vpack.c.b16 %v694, %v694
      %696 = vrot.lane.b32.xlu0 %v695, 112
      %v697 = vpop.permute.xlu0 %696
      %v699 = vsel %vm563, %v692, 0
      %v702 = vsel %vm579, %v697, 0
      %704 = vmatprep.subr.bf16.mxu0 0
      %705 = vmatpush1.bf16.msra.mxu0 0
      %706 = vmatprep.subr.bf16.mxu0 0
      %707 = vmatpush1.bf16.msra.mxu0 0
      %708 = vmatprep.subr.bf16.mxu0 0
      %709 = vmatpush1.bf16.msra.mxu0 0
      %710 = vmatprep.subr.bf16.mxu0 0
      %711 = vmatpush1.bf16.msra.mxu0 0
      %712 = vmatprep.subr.bf16.mxu0 0
      %713 = vmatpush1.bf16.msra.mxu0 0
      %714 = vmatprep.subr.bf16.mxu0 0
      %715 = vmatpush1.bf16.msra.mxu0 0
      %716 = vmatprep.subr.bf16.mxu0 0
      %717 = vmatpush1.bf16.msra.mxu0 0
      %718 = vmatprep.subr.bf16.mxu0 0
      %719 = vmatpush1.bf16.msra.mxu0 %v702
      %720 = vmatprep.subr.bf16.mxu0 0
      %721 = vmatpush2.bf16.msra.mxu0 0
      %722 = vmatprep.subr.bf16.mxu0 0
      %723 = vmatpush2.bf16.msra.mxu0 0
      %724 = vmatprep.subr.bf16.mxu0 0
      %725 = vmatpush2.bf16.msra.mxu0 0
      %726 = vmatprep.subr.bf16.mxu0 0
      %727 = vmatpush2.bf16.msra.mxu0 0
      %728 = vmatprep.subr.bf16.mxu0 0
      %729 = vmatpush2.bf16.msra.mxu0 0
      %730 = vmatprep.subr.bf16.mxu0 0
      %731 = vmatpush2.bf16.msra.mxu0 0
      %732 = vmatprep.subr.bf16.mxu0 0
      %733 = vmatpush2.bf16.msra.mxu0 0
      %734 = vmatprep.subr.bf16.mxu0 0
      %735 = vmatpush2.bf16.msra.mxu0 0
      %736 = vmatprep.mubr.bf16.mxu0 0
      %737 = vmatmul.mubr.bf16.gmra.mxu0 %v699
      %v738 = vpop.f32.mrf.mxu0
      %v739 = vadd.f32 0.0, %v738
      %v740 = vpop.f32.mrf.mxu0
      %v741 = vpop.f32.mrf.mxu0
      %v742 = vpop.f32.mrf.mxu0
      %743 = vdwg.mxu0
      %v744 = vpack.c.bf16 %v739, %v739
      %746 = vrot.lane.b32.xlu0 %v744, 16
      %v747 = vpop.permute.xlu0 %746
      %v750 = vsel %vm515, %v623, %v747
      %v751 = vld [vmem:[%s4] sm:$0xf]
      %v752 = vld [vmem:[%s4 + $0x4] sm:$0xf]
      %v753 = vld [vmem:[%s4 + $0x8] sm:$0xf]
      %v754 = vld [vmem:[%s4 + $0xc] sm:$0xf]
      %v755 = vld [vmem:[%s5] sm:$0x1]
      %v757 = vlaneseq
      %v758 = vshrl.u32 %v757, 7
      %v759 = vsub.s32 0, %v758
      %v760 = vrot.slane %v755, %v759
      %v766 = vunpack.c.l.b16 %v751
      %v767 = vunpack.c.l.b16 %v752
      %v768 = vunpack.c.l.b16 %v753
      %v769 = vunpack.c.l.b16 %v754
      %v770 = vpack.c.b16 %v767, %v766
      %v771 = vpack.c.b16 %v769, %v768
      %vm774 = vcmask 261120
      %v775 = vsel %vm774, %v750, 0
      %777 = vmatprep.subr.bf16.mxu0 0
      %778 = vmatpush1.bf16.msra.mxu0 0
      %779 = vmatprep.subr.bf16.mxu0 0
      %780 = vmatpush1.bf16.msra.mxu0 0
      %781 = vmatprep.subr.bf16.mxu0 0
      %782 = vmatpush1.bf16.msra.mxu0 0
      %783 = vmatprep.subr.bf16.mxu0 0
      %784 = vmatpush1.bf16.msra.mxu0 0
      %785 = vmatprep.subr.bf16.mxu0 0
      %786 = vmatpush1.bf16.msra.mxu0 0
      %787 = vmatprep.subr.bf16.mxu0 0
      %788 = vmatpush1.bf16.msra.mxu0 0
      %789 = vmatprep.subr.bf16.mxu0 0
      %790 = vmatpush1.bf16.msra.mxu0 %v771
      %791 = vmatprep.subr.bf16.mxu0 0
      %792 = vmatpush1.bf16.msra.mxu0 %v770
      %793 = vmatprep.subr.bf16.mxu0 0
      %794 = vmatpush2.bf16.msra.mxu0 0
      %795 = vmatprep.subr.bf16.mxu0 0
      %796 = vmatpush2.bf16.msra.mxu0 0
      %797 = vmatprep.subr.bf16.mxu0 0
      %798 = vmatpush2.bf16.msra.mxu0 0
      %799 = vmatprep.subr.bf16.mxu0 0
      %800 = vmatpush2.bf16.msra.mxu0 0
      %801 = vmatprep.subr.bf16.mxu0 0
      %802 = vmatpush2.bf16.msra.mxu0 0
      %803 = vmatprep.subr.bf16.mxu0 0
      %804 = vmatpush2.bf16.msra.mxu0 0
      %805 = vmatprep.subr.bf16.mxu0 0
      %806 = vmatpush2.bf16.msra.mxu0 0
      %807 = vmatprep.subr.bf16.mxu0 0
      %808 = vmatpush2.bf16.msra.mxu0 0
      %809 = vmatprep.mubr.bf16.mxu0 0
      %810 = vmatmul.mubr.bf16.gmra.mxu0 %v775
      %v811 = vpop.f32.mrf.mxu0
      %v812 = vadd.f32 %v760, %v811
      %v813 = vpop.f32.mrf.mxu0
      %v814 = vpop.f32.mrf.mxu0
      %v815 = vpop.f32.mrf.mxu0
      %816 = vdwg.mxu0
      %v817 = vadd.f32 %v503, %v812
      %v818 = vld [vmem:[%s6] sm:$0x1]
      %v819 = vld [vmem:[%s7] sm:$0x1]
      %v820 = vsel %vm774, %v817, 0.0
      %821 = vadd.xlane.f32.xlu0 %v820
      %v822 = vpop.xlane.xlu0 %821
      %v823 = vrcp.pop 32.0
      %v824 = vmul.f32 %v822, %v823
      %v825 = vsub.f32 %v817, %v824
      %v826 = vmul.f32 %v825, %v825
      %v827 = vsel %vm774, %v826, 0.0
      %828 = vadd.xlane.f32.xlu0 %v827
      %v829 = vpop.xlane.xlu0 %828
      %v830 = vmul.f32 %v829, %v823
      %v831 = vadd.f32 %v830, 1e-05
      %v832 = vrsqrt.pop %v831
      %v833 = vmul.f32 %v825, %v832
      %v835 = vlaneseq
      %v836 = vshrl.u32 %v835, 7
      %v837 = vsub.s32 0, %v836
      %v838 = vrot.slane %v818, %v837
      %v840 = vmul.f32 %v833, %v838
      %v842 = vlaneseq
      %v843 = vshrl.u32 %v842, 7
      %v844 = vsub.s32 0, %v843
      %v845 = vrot.slane %v819, %v844
      %v847 = vadd.f32 %v840, %v845
      %v848 = vpack.c.bf16 %v847, %v847
      %v849 = vld [vmem:[%s8] sm:$0xf]
      %v850 = vld [vmem:[%s8 + $0x4] sm:$0xf]
      %v851 = vld [vmem:[%s8 + $0x8] sm:$0xf]
      %v852 = vld [vmem:[%s8 + $0xc] sm:$0xf]
      %v853 = vld [vmem:[%s9] sm:$0x1]
      %v855 = vlaneseq
      %v856 = vshrl.u32 %v855, 7
      %v857 = vsub.s32 0, %v856
      %v858 = vrot.slane %v853, %v857
      %v864 = vunpack.c.l.b16 %v849
      %v865 = vunpack.c.l.b16 %v850
      %v866 = vunpack.c.l.b16 %v851
      %v867 = vunpack.c.l.b16 %v852
      %v868 = vpack.c.b16 %v865, %v864
      %v869 = vpack.c.b16 %v867, %v866
      %v873 = vsel %vm774, %v848, 0
      %875 = vmatprep.subr.bf16.mxu0 0
      %876 = vmatpush1.bf16.msra.mxu0 0
      %877 = vmatprep.subr.bf16.mxu0 0
      %878 = vmatpush1.bf16.msra.mxu0 0
      %879 = vmatprep.subr.bf16.mxu0 0
      %880 = vmatpush1.bf16.msra.mxu0 0
      %881 = vmatprep.subr.bf16.mxu0 0
      %882 = vmatpush1.bf16.msra.mxu0 0
      %883 = vmatprep.subr.bf16.mxu0 0
      %884 = vmatpush1.bf16.msra.mxu0 0
      %885 = vmatprep.subr.bf16.mxu0 0
      %886 = vmatpush1.bf16.msra.mxu0 0
      %887 = vmatprep.subr.bf16.mxu0 0
      %888 = vmatpush1.bf16.msra.mxu0 %v869
      %889 = vmatprep.subr.bf16.mxu0 0
      %890 = vmatpush1.bf16.msra.mxu0 %v868
      %891 = vmatprep.subr.bf16.mxu0 0
      %892 = vmatpush2.bf16.msra.mxu0 0
      %893 = vmatprep.subr.bf16.mxu0 0
      %894 = vmatpush2.bf16.msra.mxu0 0
      %895 = vmatprep.subr.bf16.mxu0 0
      %896 = vmatpush2.bf16.msra.mxu0 0
      %897 = vmatprep.subr.bf16.mxu0 0
      %898 = vmatpush2.bf16.msra.mxu0 0
      %899 = vmatprep.subr.bf16.mxu0 0
      %900 = vmatpush2.bf16.msra.mxu0 0
      %901 = vmatprep.subr.bf16.mxu0 0
      %902 = vmatpush2.bf16.msra.mxu0 0
      %903 = vmatprep.subr.bf16.mxu0 0
      %904 = vmatpush2.bf16.msra.mxu0 0
      %905 = vmatprep.subr.bf16.mxu0 0
      %906 = vmatpush2.bf16.msra.mxu0 0
      %907 = vmatprep.mubr.bf16.mxu0 0
      %908 = vmatmul.mubr.bf16.gmra.mxu0 %v873
      %v909 = vpop.f32.mrf.mxu0
      %v910 = vadd.f32 %v858, %v909
      %v911 = vpop.f32.mrf.mxu0
      %v912 = vpop.f32.mrf.mxu0
      %v913 = vpop.f32.mrf.mxu0
      %914 = vdwg.mxu0
      %v915 = vmul.f32 %v910, 0.5
      %v916 = vmul.f32 %v910, 0.044715
      %v917 = vmul.f32 %v916, %v910
      %v918 = vmul.f32 %v917, %v910
      %v919 = vadd.f32 %v910, %v918
      %v920 = vmul.f32 %v919, 0.7978846
      %v921 = vtanh.pop %v920
      %v922 = vadd.f32 %v921, 1.0
      %v923 = vmul.f32 %v915, %v922
      %v924 = vpack.c.bf16 %v923, %v923
      %v925 = vld [vmem:[%s10] sm:$0xf]
      %v926 = vld [vmem:[%s10 + $0x4] sm:$0xf]
      %v927 = vld [vmem:[%s10 + $0x8] sm:$0xf]
      %v928 = vld [vmem:[%s10 + $0xc] sm:$0xf]
      %v929 = vld [vmem:[%s10 + $0x10] sm:$0xf]
      %v930 = vld [vmem:[%s10 + $0x14] sm:$0xf]
      %v931 = vld [vmem:[%s10 + $0x18] sm:$0xf]
      %v932 = vld [vmem:[%s10 + $0x1c] sm:$0xf]
      %v933 = vld [vmem:[%s10 + $0x20] sm:$0xf]
      %v934 = vld [vmem:[%s10 + $0x24] sm:$0xf]
      %v935 = vld [vmem:[%s10 + $0x28] sm:$0xf]
      %v936 = vld [vmem:[%s10 + $0x2c] sm:$0xf]
      %v937 = vld [vmem:[%s10 + $0x30] sm:$0xf]
      %v938 = vld [vmem:[%s10 + $0x34] sm:$0xf]
      %v939 = vld [vmem:[%s10 + $0x38] sm:$0xf]
      %v940 = vld [vmem:[%s10 + $0x3c] sm:$0xf]
      %v941 = vld [vmem:[%s11] sm:$0x1]
      %v943 = vlaneseq
      %v944 = vshrl.u32 %v943, 7
      %v945 = vsub.s32 0, %v944
      %v946 = vrot.slane %v941, %v945
      %v964 = vunpack.c.l.b16 %v925
      %v965 = vunpack.c.l.b16 %v926
      %v966 = vunpack.c.l.b16 %v927
      %v967 = vunpack.c.l.b16 %v928
      %v968 = vunpack.c.l.b16 %v929
      %v969 = vunpack.c.l.b16 %v930
      %v970 = vunpack.c.l.b16 %v931
      %v971 = vunpack.c.l.b16 %v932
      %v972 = vunpack.c.l.b16 %v933
      %v973 = vunpack.c.l.b16 %v934
      %v974 = vunpack.c.l.b16 %v935
      %v975 = vunpack.c.l.b16 %v936
      %v976 = vunpack.c.l.b16 %v937
      %v977 = vunpack.c.l.b16 %v938
      %v978 = vunpack.c.l.b16 %v939
      %v979 = vunpack.c.l.b16 %v940
      %v980 = vpack.c.b16 %v965, %v964
      %v981 = vpack.c.b16 %v967, %v966
      %v982 = vpack.c.b16 %v969, %v968
      %v983 = vpack.c.b16 %v971, %v970
      %v984 = vpack.c.b16 %v973, %v972
      %v985 = vpack.c.b16 %v975, %v974
      %v986 = vpack.c.b16 %v977, %v976
      %v987 = vpack.c.b16 %v979, %v978
      %996 = vmatprep.subr.bf16.mxu0 0
      %997 = vmatpush1.bf16.msra.mxu0 %v987
      %998 = vmatprep.subr.bf16.mxu0 0
      %999 = vmatpush1.bf16.msra.mxu0 %v986
      %1000 = vmatprep.subr.bf16.mxu0 0
      %1001 = vmatpush1.bf16.msra.mxu0 %v985
      %1002 = vmatprep.subr.bf16.mxu0 0
      %1003 = vmatpush1.bf16.msra.mxu0 %v984
      %1004 = vmatprep.subr.bf16.mxu0 0
      %1005 = vmatpush1.bf16.msra.mxu0 %v983
      %1006 = vmatprep.subr.bf16.mxu0 0
      %1007 = vmatpush1.bf16.msra.mxu0 %v982
      %1008 = vmatprep.subr.bf16.mxu0 0
      %1009 = vmatpush1.bf16.msra.mxu0 %v981
      %1010 = vmatprep.subr.bf16.mxu0 0
      %1011 = vmatpush1.bf16.msra.mxu0 %v980
      %1012 = vmatprep.subr.bf16.mxu0 0
      %1013 = vmatpush2.bf16.msra.mxu0 0
      %1014 = vmatprep.subr.bf16.mxu0 0
      %1015 = vmatpush2.bf16.msra.mxu0 0
      %1016 = vmatprep.subr.bf16.mxu0 0
      %1017 = vmatpush2.bf16.msra.mxu0 0
      %1018 = vmatprep.subr.bf16.mxu0 0
      %1019 = vmatpush2.bf16.msra.mxu0 0
      %1020 = vmatprep.subr.bf16.mxu0 0
      %1021 = vmatpush2.bf16.msra.mxu0 0
      %1022 = vmatprep.subr.bf16.mxu0 0
      %1023 = vmatpush2.bf16.msra.mxu0 0
      %1024 = vmatprep.subr.bf16.mxu0 0
      %1025 = vmatpush2.bf16.msra.mxu0 0
      %1026 = vmatprep.subr.bf16.mxu0 0
      %1027 = vmatpush2.bf16.msra.mxu0 0
      %1028 = vmatprep.mubr.bf16.mxu0 0
      %1029 = vmatmul.mubr.bf16.gmra.mxu0 %v924
      %v1030 = vpop.f32.mrf.mxu0
      %v1031 = vadd.f32 %v946, %v1030
      %v1032 = vpop.f32.mrf.mxu0
      %v1033 = vpop.f32.mrf.mxu0
      %v1034 = vpop.f32.mrf.mxu0
      %1035 = vdwg.mxu0
      %v1036 = vadd.f32 %v817, %v1031
      %1037 = vst.msk [vmem:[%s501] sm:$0xff] %vm774, %v1036
      %p1038 = scmp.lt.s32.totalorder %s27, 1
      %s1039 = scalar_select %p1038, %s27, 1
      %p1040 = scmp.lt.s32.totalorder %s28, 0
      %s1041 = scalar_select %p1040, %s28, 0
      %s1042 = sadd.s32 %s1041, %s1039
      %s1043 = smul.addr %s1042, 8
      %s1044 = scalar_lea.vmem %s12, %s1043
      // Predicated region
      $region69: #{gpt_forward.6} parent=67 // pred_check
        %p1045 = pneg %p331
      $region70: #{gpt_forward.6} parent=67 // pred_check_branch
        %1047 = sbr.rel (%p1045) target = $region72
      $region71: #{gpt_forward.6} parent=67 // pred_region
        _
      $region72: #{gpt_forward.6} parent=67 // pred_fallthru
        _
    $region68: #{gpt_forward.6} parent=5 // pred_fallthru
      _
    %p1048 = scmp.le.s32.totalorder 2, %s18
    // Predicated region
    $region73: #{gpt_forward.6} parent=5 // pred_check
      %p1049 = pneg %p1048
    $region74: #{gpt_forward.6} parent=5 // pred_check_branch
      %1051 = sbr.rel (%p1049) target = $region76
    $region75: #{gpt_forward.6} parent=5 // pred_region
      %s1052 = ssub.s32 %s18, 2
      // Predicated region
      $region77: #{gpt_forward.6} parent=75 // pred_check
        %p1053 = pneg %p337
      $region78: #{gpt_forward.6} parent=75 // pred_check_branch
        %1055 = sbr.rel (%p1053) target = $region80
      $region79: #{gpt_forward.6} parent=75 // pred_region
        %p1056 = scmp.lt.s32.totalorder %s29, 1
        %s1057 = scalar_select %p1056, %s29, 1
        %p1058 = scmp.lt.s32.totalorder %s30, 0
        %s1059 = scalar_select %p1058, %s30, 0
        %s1060 = sadd.s32 %s1059, %s1057
        %s1061 = smul.addr %s1060, 8
        %s1062 = scalar_lea.vmem %s12, %s1061
      $region80: #{gpt_forward.6} parent=75 // pred_fallthru
        _
    $region76: #{gpt_forward.6} parent=5 // pred_fallthru
      _
  $region6: #{gpt_forward.6} parent=0 // loop_footer
    %s22 = sadd.s32 1, %s18
  $region7: #{gpt_forward.6} parent=0 // loop_footer_branch
    %17 = sbr.rel target = $region3
  $region8: #{gpt_forward.6} parent=0 // loop_exit
    _

</llo_original>
